<compile_context>
chip_gen: v5e
topology: v5e:2x2
jax: 0.10.0
libtpu: 0.0.40
codegen_flags: <defaults>
</compile_context>

<pallas_src>
import functools

import jax
import jax.numpy as jnp
from jax.experimental import pallas as pl
from jax.experimental.pallas import tpu as pltpu


# genotype[0] = list of (op_name, input_index) pairs (2 per step), genotype[1] = concat
GENOTYPE = (
    [('sep_conv_3x3', 0), ('sep_conv_3x3', 1),
     ('skip_connect', 0), ('dil_conv_3x3', 1),
     ('max_pool_3x3', 2), ('skip_connect', 0),
     ('sep_conv_3x3', 3), ('max_pool_3x3', 1)],
    [2, 3, 4, 5],
)


# ------------------------------ fused cell kernel ------------------------------

def _cell_kernel(s0_ref, s1_ref, pre_ref, conv_ref, bias_ref, o_ref,
                 *, plan, concat, H, L, C, W):
    """Whole-cell forward for ONE image: every state is a lane-dense (H, L) = (H, W*C)
    f32 tile (16x128 here == exactly 2 vregs)."""
    f32 = jnp.float32
    bf16 = jnp.bfloat16

    # Boundary masks, derived from iota (pure VPU work, free under the MXU phase).
    row = jax.lax.broadcasted_iota(jnp.int32, (H, L), 0)     # row within the image
    lane = jax.lax.broadcasted_iota(jnp.int32, (H, L), 1)    # lane = w*C + c
    has_hm1 = row >= 1                                       # row h-1 exists
    has_hp1 = row <= H - 2                                   # row h+1 exists
    has_wm1 = lane >= C                                      # column w-1 exists
    has_wp1 = lane < (W - 1) * C                             # column w+1 exists

    def mm(a, b):
        # MXU matmul: bf16 inputs, f32 accumulation (native MXU mode).
        return jnp.dot(a.astype(bf16), b, preferred_element_type=f32)

    def hroll(x, dh):
        # Cyclic sublane roll: output row h <- input row (h + dh) mod H.  Exact (XLU).
        return pltpu.roll(x, shift=(-dh) % H, axis=0)

    def hshift(x, dh):
        # Row shift with zero fill at the image edge (== the conv's zero padding).
        if dh == 0:
            return x
        valid = (row >= -dh) & (row <= H - 1 - dh)
        return jnp.where(valid, hroll(x, dh), 0.0)

    def wroll(x, dw_):
        # Cyclic lane roll: output column w <- input column (w + dw) mod W. Exact (XLU).
        return pltpu.roll(x, shift=(-dw_ * C) % L, axis=1)

    def relu_conv1x1_bn(x, mslot, bslot):
        # ReLU -> 1x1 conv (block-diagonal weights, BN scale folded) -> + bias.
        return mm(jnp.maximum(x, 0.0), pre_ref[mslot]) + bias_ref[bslot]

    def dw_pw_bn(x, mslot, bslot, d):
        # ReLU -> depthwise 3x3 (dilation d, zero pad d) -> pointwise 1x1 -> folded BN,
        # as ONE K=3L matmul: [shift(-d) | x | shift(+d)] @ [kh0; kh1; kh2] band matrix.
        xr = jnp.maximum(x, 0.0)
        xcat = jnp.concatenate([hshift(xr, -d), xr, hshift(xr, d)], axis=1)   # (H, 3L)
        return mm(xcat, conv_ref[mslot]) + bias_ref[bslot]

    def max_pool_3x3(x):
        # 3x3 / stride 1 / pad 1 max pool.  Neighbour taps are exact XLU rolls; invalid
        # (padded) taps are replaced by the always-valid centre tap.
        left = jnp.where(has_wm1, wroll(x, -1), x)            # value at w-1
        right = jnp.where(has_wp1, wroll(x, 1), x)            # value at w+1
        wmax = jnp.maximum(x, jnp.maximum(left, right))
        up = jnp.where(has_hm1, hroll(wmax, -1), wmax)        # value at h-1
        dn = jnp.where(has_hp1, hroll(wmax, 1), wmax)         # value at h+1
        return jnp.maximum(wmax, jnp.maximum(up, dn))

    # Preprocess both inputs (ReLUConvBN with a 1x1 conv).
    states = [relu_conv1x1_bn(s0_ref[...].astype(f32), 0, 0),
              relu_conv1x1_bn(s1_ref[...].astype(f32), 1, 1)]

    # The 4 cell steps (2 edges each); the h1 + h2 add is fused right here.
    # TODO(synk): drop_path only fires in training mode with drop_prob > 0; this is the
    #             eval-mode forward, so it is a no-op by construction.
    pending = []
    for name, src, mslot, bslot in plan:
        x = states[src]
        if name == 'skip_connect':                  # Identity (normal cell, stride 1)
            h = x
        elif name == 'max_pool_3x3':
            h = max_pool_3x3(x)
        elif name == 'sep_conv_3x3':                # SepConv = two (ReLU,dw3x3,pw1x1,BN) units
            h = dw_pw_bn(x, mslot, bslot, 1)
            h = dw_pw_bn(h, mslot + 1, bslot + 1, 1)
        else:                                       # 'dil_conv_3x3' (dilation 2, pad 2)
            h = dw_pw_bn(x, mslot, bslot, 2)
        pending.append(h)
        if len(pending) == 2:
            states.append(pending[0] + pending[1])
            pending = []

    # Channel concat == stacking the chosen states along the leading output axis
    # (the wrapper turns this back into NCHW).  Lane-dense (H, 128) stores throughout.
    for j, src in enumerate(concat):
        o_ref[j] = states[src].astype(o_ref.dtype)


# ------------------------------ parameter init (module semantics) ------------------------------

def _fold_bn(key, C):
    kg, kb = jax.random.split(key)
    gamma = 1.0 + 0.1 * jax.random.normal(kg, (C,), jnp.float32)
    beta = 0.1 * jax.random.normal(kb, (C,), jnp.float32)
    running_mean = jnp.zeros((C,), jnp.float32)
    running_var = jnp.ones((C,), jnp.float32)
    eps = 1e-5
    scale = gamma / jnp.sqrt(running_var + eps)
    bias = beta - running_mean * scale
    return scale, bias


def _init_relu_conv_bn(key, Cin, Cout):
    kw, kbn = jax.random.split(key)
    w = 0.1 * jax.random.normal(kw, (Cin, Cout), jnp.float32)    # 1x1 conv (ci -> co)
    s, b = _fold_bn(kbn, Cout)
    return (w, s, b)


def _init_sep_unit(key, C):
    k1, k2, k3 = jax.random.split(key, 3)
    dw = 0.1 * jax.random.normal(k1, (3, 3, C), jnp.float32)     # depthwise 3x3
    pw = 0.1 * jax.random.normal(k2, (C, C), jnp.float32)        # pointwise 1x1
    s, b = _fold_bn(k3, C)
    return dict(dw=dw, pw=pw, s=s, b=b)


def init_cell_params(key, C_prev_prev, C_prev, C):
    keys = jax.random.split(key, 2 + len(GENOTYPE[0]))
    params = {
        'pre0': _init_relu_conv_bn(keys[0], C_prev_prev, C),
        'pre1': _init_relu_conv_bn(keys[1], C_prev, C),
        'ops': [],
    }
    for k, (name, _) in zip(keys[2:], GENOTYPE[0]):
        if name == 'sep_conv_3x3':      # SepConv = two stacked (ReLU, dw3x3, pw1x1, BN)
            ka, kb = jax.random.split(k)
            params['ops'].append({'u1': _init_sep_unit(ka, C),
                                  'u2': _init_sep_unit(kb, C)})
        elif name == 'dil_conv_3x3':    # DilConv = one dilated unit (dil=2, pad=2)
            params['ops'].append({'u': _init_sep_unit(k, C)})
        else:
            params['ops'].append({})
    return params


# ------------------------------ host-side packing into kernel operands ------------------------------

def _pack_preprocess(p, W):
    w, s, b = p
    mat = jnp.kron(jnp.eye(W, dtype=jnp.float32), w * s[None, :])   # (W*Cin, W*Cout)
    return mat, jnp.tile(b, W)


def _pack_conv_unit(u, W, d):
    """Depthwise 3x3 (dilation d) + pointwise 1x1 + folded BN as ONE (3*W*C, W*C) band
    matrix: the three kernel-row blocks [kh=0; kh=1; kh=2] are stacked along K so the
    kernel issues a single K=3L MXU matmul per unit."""
    dw, pw, s, b = u['dw'], u['pw'], u['s'], u['b']
    C, Cout = pw.shape
    pws = pw * s[None, :]                      # BN scale folded into the pointwise conv
    blocks = []
    for kh in range(3):
        m = jnp.zeros((W * C, W * Cout), jnp.float32)
        for kw in range(3):
            off = (kw - 1) * d                 # W tap offset
            wsel = jnp.eye(W, k=-off, dtype=jnp.float32)   # selects w_in = w_out + off
            m = m + jnp.kron(wsel, dw[kh, kw][:, None] * pws)
        blocks.append(m)
    return jnp.concatenate(blocks, axis=0), jnp.tile(b, W)          # (3*W*C, W*Cout)


def _build_plan():
    plan, mslot, bslot = [], 0, 2
    for name, src in GENOTYPE[0]:
        plan.append((name, src, mslot, bslot))
        if name == 'sep_conv_3x3':
            mslot, bslot = mslot + 2, bslot + 2
        elif name == 'dil_conv_3x3':
            mslot, bslot = mslot + 1, bslot + 1
    return tuple(plan)


def pack_cell_params(params, W, C):
    """Fold all weights + eval-mode BN into stacked bf16 matmul operands for the fused
    kernel.  Constants total ~0.75 MiB (bf16) vs ~1.7 MiB before."""
    pre_mats, conv_mats, biases = [], [], []
    for pre in ('pre0', 'pre1'):
        m, b = _pack_preprocess(params[pre], W)
        pre_mats.append(m)
        biases.append(b)
    for (name, _), p in zip(GENOTYPE[0], params['ops']):
        if name == 'sep_conv_3x3':
            for u in ('u1', 'u2'):
                m, b = _pack_conv_unit(p[u], W, 1)
                conv_mats.append(m)
                biases.append(b)
        elif name == 'dil_conv_3x3':
            m, b = _pack_conv_unit(p['u'], W, 2)
            conv_mats.append(m)
            biases.append(b)
    L = W * C
    # Stacking requires C_prev_prev == C_prev == C (true here).  Real NetworkCIFAR cells
    # after a reduction would need per-input mats instead of one stacked operand.
    assert all(m.shape == (L, L) for m in pre_mats), \
        "pack_cell_params assumes C_prev_prev == C_prev == C"
    assert all(m.shape == (3 * L, L) for m in conv_mats)
    return dict(
        pre_mats=jnp.stack(pre_mats).astype(jnp.bfloat16),          # (2, L, L)      bf16
        conv_mats=jnp.stack(conv_mats).astype(jnp.bfloat16),        # (7, 3L, L)     bf16
        biases=jnp.stack(biases).reshape(len(biases), 1, L),        # (9, 1, L)      f32
    )


# ------------------------------ cell forward (NCHW interface) ------------------------------

def cell_forward(packed, s0, s1, drop_prob=0.0):
    """s0, s1: NCHW (PyTorch convention). Returns NCHW with multiplier*C channels."""
    N, C0, H, W = s0.shape
    C1 = s1.shape[1]
    L = packed['pre_mats'].shape[-1]
    C = L // W
    n_out = len(GENOTYPE[1])

    # NCHW -> lane-dense (N*H, W*C); pure layout plumbing at the kernel boundary.
    s0l = jnp.transpose(s0, (0, 2, 3, 1)).reshape(N * H, W * C0)
    s1l = jnp.transpose(s1, (0, 2, 3, 1)).reshape(N * H, W * C1)

    kern = functools.partial(_cell_kernel, plan=_build_plan(),
                             concat=tuple(GENOTYPE[1]), H=H, L=L, C=C, W=W)
    out = pl.pallas_call(
        kern,
        out_shape=jax.ShapeDtypeStruct((n_out, N * H, L), jnp.float32),
        # Grid over batch: "parallel" lets v7x shard images across its 2 TensorCores;
        # constants keep a constant index_map so they stay resident across steps.
        grid=(N,),
        in_specs=[
            pl.BlockSpec((H, W * C0), lambda n: (n, 0)),
            pl.BlockSpec((H, W * C1), lambda n: (n, 0)),
            pl.BlockSpec(tuple(packed['pre_mats'].shape), lambda n: (0, 0, 0)),
            pl.BlockSpec(tuple(packed['conv_mats'].shape), lambda n: (0, 0, 0)),
            pl.BlockSpec(tuple(packed['biases'].shape), lambda n: (0, 0, 0)),
        ],
        out_specs=pl.BlockSpec((n_out, H, L), lambda n: (0, n, 0)),
        compiler_params=pltpu.CompilerParams(dimension_semantics=("parallel",)),
    )(s0l, s1l, packed['pre_mats'], packed['conv_mats'], packed['biases'])

    # (n_out, N*H, W*C) -> NCHW channel concat (torch.cat order: channel = j*C + c).
    out = out.reshape(n_out, N, H, W, C).transpose(1, 0, 4, 2, 3)
    return out.reshape(N, n_out * C, H, W)


# ------------------------------ main ------------------------------

if __name__ == "__main__":
    key = jax.random.PRNGKey(0)
    kp, k0, k1 = jax.random.split(key, 3)
    N, C_pp, C_p, C, H, W = 2, 8, 8, 8, 16, 16
    params = init_cell_params(kp, C_pp, C_p, C)
    packed = pack_cell_params(params, W, C)
    s0 = jax.random.normal(k0, (N, C_pp, H, W), jnp.float32)
    s1 = jax.random.normal(k1, (N, C_p, H, W), jnp.float32)

    out = jax.jit(cell_forward)(packed, s0, s1)
    out = jax.block_until_ready(out)
    assert out.shape == (N, len(GENOTYPE[1]) * C, H, W), out.shape
    assert bool(jnp.all(jnp.isfinite(out)))
    print("KERNEL_OK")
</pallas_src>

<mosaic_0001>
module attributes {stable_mosaic.version = 11 : i64} {
  func.func @_cell_kernel(%arg0: i32, %arg1: memref<16x128xf32, #tpu.memory_space<vmem>>, %arg2: memref<16x128xf32, #tpu.memory_space<vmem>>, %arg3: memref<2x128x128xbf16, #tpu.memory_space<vmem>>, %arg4: memref<7x384x128xbf16, #tpu.memory_space<vmem>>, %arg5: memref<9x1x128xf32, #tpu.memory_space<vmem>>, %arg6: memref<4x16x128xf32, #tpu.memory_space<vmem>>) attributes {dimension_semantics = [#tpu.dimension_semantics<parallel>], iteration_bounds = array<i64: 2>, scalar_prefetch = 0 : i64, scratch_operands = 0 : i64, tpu.core_type = #tpu.core_type<tc>, window_params = [{transform_indices = @transform_0, window_bounds = array<i64: 16, 128>}, {transform_indices = @transform_1, window_bounds = array<i64: 16, 128>}, {pipeline_mode = #tpu.pipeline_mode<synchronous>, transform_indices = @transform_2, window_bounds = array<i64: 2, 128, 128>}, {pipeline_mode = #tpu.pipeline_mode<synchronous>, transform_indices = @transform_3, window_bounds = array<i64: 7, 384, 128>}, {pipeline_mode = #tpu.pipeline_mode<synchronous>, transform_indices = @transform_4, window_bounds = array<i64: 9, 1, 128>}, {transform_indices = @transform_5, window_bounds = array<i64: 4, 16, 128>}]} {
    %0 = tpu.iota {dimensions = array<i32: 0>} : vector<16x128xi32>
    %1 = tpu.iota {dimensions = array<i32: 1>} : vector<16x128xi32>
    %c1_i32 = arith.constant 1 : i32
    %2 = vector.broadcast %c1_i32 : i32 to vector<16x128xi32>
    %3 = arith.cmpi sge, %0, %2 : vector<16x128xi32>
    %c14_i32 = arith.constant 14 : i32
    %4 = vector.broadcast %c14_i32 : i32 to vector<16x128xi32>
    %5 = arith.cmpi sle, %0, %4 : vector<16x128xi32>
    %c8_i32 = arith.constant 8 : i32
    %6 = vector.broadcast %c8_i32 : i32 to vector<16x128xi32>
    %7 = arith.cmpi sge, %1, %6 : vector<16x128xi32>
    %c120_i32 = arith.constant 120 : i32
    %8 = vector.broadcast %c120_i32 : i32 to vector<16x128xi32>
    %9 = arith.cmpi slt, %1, %8 : vector<16x128xi32>
    %c0 = arith.constant 0 : index
    %c0_0 = arith.constant 0 : index
    %10 = vector.load %arg1[%c0, %c0_0] : memref<16x128xf32, #tpu.memory_space<vmem>>, vector<16x128xf32>
    %cst = arith.constant 0.000000e+00 : f32
    %11 = vector.broadcast %cst : f32 to vector<16x128xf32>
    %12 = arith.maximumf %10, %11 : vector<16x128xf32>
    %c0_1 = arith.constant 0 : index
    %c0_2 = arith.constant 0 : index
    %c0_3 = arith.constant 0 : index
    %13 = vector.load %arg3[%c0_1, %c0_2, %c0_3] : memref<2x128x128xbf16, #tpu.memory_space<vmem>>, vector<1x128x128xbf16>
    %14 = vector.shape_cast %13 : vector<1x128x128xbf16> to vector<128x128xbf16>
    %15 = arith.truncf %12 : vector<16x128xf32> to vector<16x128xbf16>
    %cst_4 = arith.constant dense<0.000000e+00> : vector<16x128xf32>
    %16 = tpu.matmul %15, %14, %cst_4 {dimension_numbers = #tpu.dot_dimension_numbers<[1], [0], [0], [1], [0, 0, 1, 1], [], []>} : vector<16x128xbf16>, vector<128x128xbf16>, vector<16x128xf32> -> vector<16x128xf32>
    %c0_5 = arith.constant 0 : index
    %c0_6 = arith.constant 0 : index
    %c0_7 = arith.constant 0 : index
    %17 = vector.load %arg5[%c0_5, %c0_6, %c0_7] : memref<9x1x128xf32, #tpu.memory_space<vmem>>, vector<1x1x128xf32>
    %18 = vector.shape_cast %17 : vector<1x1x128xf32> to vector<1x128xf32>
    %19 = vector.broadcast %18 : vector<1x128xf32> to vector<16x128xf32>
    %20 = arith.addf %16, %19 : vector<16x128xf32>
    %c0_8 = arith.constant 0 : index
    %c0_9 = arith.constant 0 : index
    %21 = vector.load %arg2[%c0_8, %c0_9] : memref<16x128xf32, #tpu.memory_space<vmem>>, vector<16x128xf32>
    %cst_10 = arith.constant 0.000000e+00 : f32
    %22 = vector.broadcast %cst_10 : f32 to vector<16x128xf32>
    %23 = arith.maximumf %21, %22 : vector<16x128xf32>
    %c1 = arith.constant 1 : index
    %c0_11 = arith.constant 0 : index
    %c0_12 = arith.constant 0 : index
    %24 = vector.load %arg3[%c1, %c0_11, %c0_12] : memref<2x128x128xbf16, #tpu.memory_space<vmem>>, vector<1x128x128xbf16>
    %25 = vector.shape_cast %24 : vector<1x128x128xbf16> to vector<128x128xbf16>
    %26 = arith.truncf %23 : vector<16x128xf32> to vector<16x128xbf16>
    %cst_13 = arith.constant dense<0.000000e+00> : vector<16x128xf32>
    %27 = tpu.matmul %26, %25, %cst_13 {dimension_numbers = #tpu.dot_dimension_numbers<[1], [0], [0], [1], [0, 0, 1, 1], [], []>} : vector<16x128xbf16>, vector<128x128xbf16>, vector<16x128xf32> -> vector<16x128xf32>
    %c1_14 = arith.constant 1 : index
    %c0_15 = arith.constant 0 : index
    %c0_16 = arith.constant 0 : index
    %28 = vector.load %arg5[%c1_14, %c0_15, %c0_16] : memref<9x1x128xf32, #tpu.memory_space<vmem>>, vector<1x1x128xf32>
    %29 = vector.shape_cast %28 : vector<1x1x128xf32> to vector<1x128xf32>
    %30 = vector.broadcast %29 : vector<1x128xf32> to vector<16x128xf32>
    %31 = arith.addf %27, %30 : vector<16x128xf32>
    %cst_17 = arith.constant 0.000000e+00 : f32
    %32 = vector.broadcast %cst_17 : f32 to vector<16x128xf32>
    %33 = arith.maximumf %20, %32 : vector<16x128xf32>
    %c1_i32_18 = arith.constant 1 : i32
    %34 = vector.broadcast %c1_i32_18 : i32 to vector<16x128xi32>
    %35 = arith.cmpi sge, %0, %34 : vector<16x128xi32>
    %c16_i32 = arith.constant 16 : i32
    %36 = vector.broadcast %c16_i32 : i32 to vector<16x128xi32>
    %37 = arith.cmpi sle, %0, %36 : vector<16x128xi32>
    %38 = arith.andi %35, %37 : vector<16x128xi1>
    %c1_i32_19 = arith.constant 1 : i32
    %39 = tpu.dynamic_rotate %33 by %c1_i32_19 dim 0 : vector<16x128xf32>, i32 -> vector<16x128xf32>
    %cst_20 = arith.constant 0.000000e+00 : f32
    %40 = vector.broadcast %cst_20 : f32 to vector<16x128xf32>
    %41 = arith.select %38, %39, %40 : vector<16x128xi1>, vector<16x128xf32>
    %c-1_i32 = arith.constant -1 : i32
    %42 = vector.broadcast %c-1_i32 : i32 to vector<16x128xi32>
    %43 = arith.cmpi sge, %0, %42 : vector<16x128xi32>
    %c14_i32_21 = arith.constant 14 : i32
    %44 = vector.broadcast %c14_i32_21 : i32 to vector<16x128xi32>
    %45 = arith.cmpi sle, %0, %44 : vector<16x128xi32>
    %46 = arith.andi %43, %45 : vector<16x128xi1>
    %c15_i32 = arith.constant 15 : i32
    %47 = tpu.dynamic_rotate %33 by %c15_i32 dim 0 : vector<16x128xf32>, i32 -> vector<16x128xf32>
    %cst_22 = arith.constant 0.000000e+00 : f32
    %48 = vector.broadcast %cst_22 : f32 to vector<16x128xf32>
    %49 = arith.select %46, %47, %48 : vector<16x128xi1>, vector<16x128xf32>
    %50 = tpu.concatenate %41, %33, %49 in 1 : vector<16x128xf32>, vector<16x128xf32>, vector<16x128xf32> -> vector<16x384xf32>
    %c0_23 = arith.constant 0 : index
    %c0_24 = arith.constant 0 : index
    %c0_25 = arith.constant 0 : index
    %51 = vector.load %arg4[%c0_23, %c0_24, %c0_25] : memref<7x384x128xbf16, #tpu.memory_space<vmem>>, vector<1x384x128xbf16>
    %52 = vector.shape_cast %51 : vector<1x384x128xbf16> to vector<384x128xbf16>
    %53 = arith.truncf %50 : vector<16x384xf32> to vector<16x384xbf16>
    %cst_26 = arith.constant dense<0.000000e+00> : vector<16x128xf32>
    %54 = tpu.matmul %53, %52, %cst_26 {dimension_numbers = #tpu.dot_dimension_numbers<[1], [0], [0], [1], [0, 0, 1, 1], [], []>} : vector<16x384xbf16>, vector<384x128xbf16>, vector<16x128xf32> -> vector<16x128xf32>
    %c2 = arith.constant 2 : index
    %c0_27 = arith.constant 0 : index
    %c0_28 = arith.constant 0 : index
    %55 = vector.load %arg5[%c2, %c0_27, %c0_28] : memref<9x1x128xf32, #tpu.memory_space<vmem>>, vector<1x1x128xf32>
    %56 = vector.shape_cast %55 : vector<1x1x128xf32> to vector<1x128xf32>
    %57 = vector.broadcast %56 : vector<1x128xf32> to vector<16x128xf32>
    %58 = arith.addf %54, %57 : vector<16x128xf32>
    %cst_29 = arith.constant 0.000000e+00 : f32
    %59 = vector.broadcast %cst_29 : f32 to vector<16x128xf32>
    %60 = arith.maximumf %58, %59 : vector<16x128xf32>
    %c1_i32_30 = arith.constant 1 : i32
    %61 = vector.broadcast %c1_i32_30 : i32 to vector<16x128xi32>
    %62 = arith.cmpi sge, %0, %61 : vector<16x128xi32>
    %c16_i32_31 = arith.constant 16 : i32
    %63 = vector.broadcast %c16_i32_31 : i32 to vector<16x128xi32>
    %64 = arith.cmpi sle, %0, %63 : vector<16x128xi32>
    %65 = arith.andi %62, %64 : vector<16x128xi1>
    %c1_i32_32 = arith.constant 1 : i32
    %66 = tpu.dynamic_rotate %60 by %c1_i32_32 dim 0 : vector<16x128xf32>, i32 -> vector<16x128xf32>
    %cst_33 = arith.constant 0.000000e+00 : f32
    %67 = vector.broadcast %cst_33 : f32 to vector<16x128xf32>
    %68 = arith.select %65, %66, %67 : vector<16x128xi1>, vector<16x128xf32>
    %c-1_i32_34 = arith.constant -1 : i32
    %69 = vector.broadcast %c-1_i32_34 : i32 to vector<16x128xi32>
    %70 = arith.cmpi sge, %0, %69 : vector<16x128xi32>
    %c14_i32_35 = arith.constant 14 : i32
    %71 = vector.broadcast %c14_i32_35 : i32 to vector<16x128xi32>
    %72 = arith.cmpi sle, %0, %71 : vector<16x128xi32>
    %73 = arith.andi %70, %72 : vector<16x128xi1>
    %c15_i32_36 = arith.constant 15 : i32
    %74 = tpu.dynamic_rotate %60 by %c15_i32_36 dim 0 : vector<16x128xf32>, i32 -> vector<16x128xf32>
    %cst_37 = arith.constant 0.000000e+00 : f32
    %75 = vector.broadcast %cst_37 : f32 to vector<16x128xf32>
    %76 = arith.select %73, %74, %75 : vector<16x128xi1>, vector<16x128xf32>
    %77 = tpu.concatenate %68, %60, %76 in 1 : vector<16x128xf32>, vector<16x128xf32>, vector<16x128xf32> -> vector<16x384xf32>
    %c1_38 = arith.constant 1 : index
    %c0_39 = arith.constant 0 : index
    %c0_40 = arith.constant 0 : index
    %78 = vector.load %arg4[%c1_38, %c0_39, %c0_40] : memref<7x384x128xbf16, #tpu.memory_space<vmem>>, vector<1x384x128xbf16>
    %79 = vector.shape_cast %78 : vector<1x384x128xbf16> to vector<384x128xbf16>
    %80 = arith.truncf %77 : vector<16x384xf32> to vector<16x384xbf16>
    %cst_41 = arith.constant dense<0.000000e+00> : vector<16x128xf32>
    %81 = tpu.matmul %80, %79, %cst_41 {dimension_numbers = #tpu.dot_dimension_numbers<[1], [0], [0], [1], [0, 0, 1, 1], [], []>} : vector<16x384xbf16>, vector<384x128xbf16>, vector<16x128xf32> -> vector<16x128xf32>
    %c3 = arith.constant 3 : index
    %c0_42 = arith.constant 0 : index
    %c0_43 = arith.constant 0 : index
    %82 = vector.load %arg5[%c3, %c0_42, %c0_43] : memref<9x1x128xf32, #tpu.memory_space<vmem>>, vector<1x1x128xf32>
    %83 = vector.shape_cast %82 : vector<1x1x128xf32> to vector<1x128xf32>
    %84 = vector.broadcast %83 : vector<1x128xf32> to vector<16x128xf32>
    %85 = arith.addf %81, %84 : vector<16x128xf32>
    %cst_44 = arith.constant 0.000000e+00 : f32
    %86 = vector.broadcast %cst_44 : f32 to vector<16x128xf32>
    %87 = arith.maximumf %31, %86 : vector<16x128xf32>
    %c1_i32_45 = arith.constant 1 : i32
    %88 = vector.broadcast %c1_i32_45 : i32 to vector<16x128xi32>
    %89 = arith.cmpi sge, %0, %88 : vector<16x128xi32>
    %c16_i32_46 = arith.constant 16 : i32
    %90 = vector.broadcast %c16_i32_46 : i32 to vector<16x128xi32>
    %91 = arith.cmpi sle, %0, %90 : vector<16x128xi32>
    %92 = arith.andi %89, %91 : vector<16x128xi1>
    %c1_i32_47 = arith.constant 1 : i32
    %93 = tpu.dynamic_rotate %87 by %c1_i32_47 dim 0 : vector<16x128xf32>, i32 -> vector<16x128xf32>
    %cst_48 = arith.constant 0.000000e+00 : f32
    %94 = vector.broadcast %cst_48 : f32 to vector<16x128xf32>
    %95 = arith.select %92, %93, %94 : vector<16x128xi1>, vector<16x128xf32>
    %c-1_i32_49 = arith.constant -1 : i32
    %96 = vector.broadcast %c-1_i32_49 : i32 to vector<16x128xi32>
    %97 = arith.cmpi sge, %0, %96 : vector<16x128xi32>
    %c14_i32_50 = arith.constant 14 : i32
    %98 = vector.broadcast %c14_i32_50 : i32 to vector<16x128xi32>
    %99 = arith.cmpi sle, %0, %98 : vector<16x128xi32>
    %100 = arith.andi %97, %99 : vector<16x128xi1>
    %c15_i32_51 = arith.constant 15 : i32
    %101 = tpu.dynamic_rotate %87 by %c15_i32_51 dim 0 : vector<16x128xf32>, i32 -> vector<16x128xf32>
    %cst_52 = arith.constant 0.000000e+00 : f32
    %102 = vector.broadcast %cst_52 : f32 to vector<16x128xf32>
    %103 = arith.select %100, %101, %102 : vector<16x128xi1>, vector<16x128xf32>
    %104 = tpu.concatenate %95, %87, %103 in 1 : vector<16x128xf32>, vector<16x128xf32>, vector<16x128xf32> -> vector<16x384xf32>
    %c2_53 = arith.constant 2 : index
    %c0_54 = arith.constant 0 : index
    %c0_55 = arith.constant 0 : index
    %105 = vector.load %arg4[%c2_53, %c0_54, %c0_55] : memref<7x384x128xbf16, #tpu.memory_space<vmem>>, vector<1x384x128xbf16>
    %106 = vector.shape_cast %105 : vector<1x384x128xbf16> to vector<384x128xbf16>
    %107 = arith.truncf %104 : vector<16x384xf32> to vector<16x384xbf16>
    %cst_56 = arith.constant dense<0.000000e+00> : vector<16x128xf32>
    %108 = tpu.matmul %107, %106, %cst_56 {dimension_numbers = #tpu.dot_dimension_numbers<[1], [0], [0], [1], [0, 0, 1, 1], [], []>} : vector<16x384xbf16>, vector<384x128xbf16>, vector<16x128xf32> -> vector<16x128xf32>
    %c4 = arith.constant 4 : index
    %c0_57 = arith.constant 0 : index
    %c0_58 = arith.constant 0 : index
    %109 = vector.load %arg5[%c4, %c0_57, %c0_58] : memref<9x1x128xf32, #tpu.memory_space<vmem>>, vector<1x1x128xf32>
    %110 = vector.shape_cast %109 : vector<1x1x128xf32> to vector<1x128xf32>
    %111 = vector.broadcast %110 : vector<1x128xf32> to vector<16x128xf32>
    %112 = arith.addf %108, %111 : vector<16x128xf32>
    %cst_59 = arith.constant 0.000000e+00 : f32
    %113 = vector.broadcast %cst_59 : f32 to vector<16x128xf32>
    %114 = arith.maximumf %112, %113 : vector<16x128xf32>
    %c1_i32_60 = arith.constant 1 : i32
    %115 = vector.broadcast %c1_i32_60 : i32 to vector<16x128xi32>
    %116 = arith.cmpi sge, %0, %115 : vector<16x128xi32>
    %c16_i32_61 = arith.constant 16 : i32
    %117 = vector.broadcast %c16_i32_61 : i32 to vector<16x128xi32>
    %118 = arith.cmpi sle, %0, %117 : vector<16x128xi32>
    %119 = arith.andi %116, %118 : vector<16x128xi1>
    %c1_i32_62 = arith.constant 1 : i32
    %120 = tpu.dynamic_rotate %114 by %c1_i32_62 dim 0 : vector<16x128xf32>, i32 -> vector<16x128xf32>
    %cst_63 = arith.constant 0.000000e+00 : f32
    %121 = vector.broadcast %cst_63 : f32 to vector<16x128xf32>
    %122 = arith.select %119, %120, %121 : vector<16x128xi1>, vector<16x128xf32>
    %c-1_i32_64 = arith.constant -1 : i32
    %123 = vector.broadcast %c-1_i32_64 : i32 to vector<16x128xi32>
    %124 = arith.cmpi sge, %0, %123 : vector<16x128xi32>
    %c14_i32_65 = arith.constant 14 : i32
    %125 = vector.broadcast %c14_i32_65 : i32 to vector<16x128xi32>
    %126 = arith.cmpi sle, %0, %125 : vector<16x128xi32>
    %127 = arith.andi %124, %126 : vector<16x128xi1>
    %c15_i32_66 = arith.constant 15 : i32
    %128 = tpu.dynamic_rotate %114 by %c15_i32_66 dim 0 : vector<16x128xf32>, i32 -> vector<16x128xf32>
    %cst_67 = arith.constant 0.000000e+00 : f32
    %129 = vector.broadcast %cst_67 : f32 to vector<16x128xf32>
    %130 = arith.select %127, %128, %129 : vector<16x128xi1>, vector<16x128xf32>
    %131 = tpu.concatenate %122, %114, %130 in 1 : vector<16x128xf32>, vector<16x128xf32>, vector<16x128xf32> -> vector<16x384xf32>
    %c3_68 = arith.constant 3 : index
    %c0_69 = arith.constant 0 : index
    %c0_70 = arith.constant 0 : index
    %132 = vector.load %arg4[%c3_68, %c0_69, %c0_70] : memref<7x384x128xbf16, #tpu.memory_space<vmem>>, vector<1x384x128xbf16>
    %133 = vector.shape_cast %132 : vector<1x384x128xbf16> to vector<384x128xbf16>
    %134 = arith.truncf %131 : vector<16x384xf32> to vector<16x384xbf16>
    %cst_71 = arith.constant dense<0.000000e+00> : vector<16x128xf32>
    %135 = tpu.matmul %134, %133, %cst_71 {dimension_numbers = #tpu.dot_dimension_numbers<[1], [0], [0], [1], [0, 0, 1, 1], [], []>} : vector<16x384xbf16>, vector<384x128xbf16>, vector<16x128xf32> -> vector<16x128xf32>
    %c5 = arith.constant 5 : index
    %c0_72 = arith.constant 0 : index
    %c0_73 = arith.constant 0 : index
    %136 = vector.load %arg5[%c5, %c0_72, %c0_73] : memref<9x1x128xf32, #tpu.memory_space<vmem>>, vector<1x1x128xf32>
    %137 = vector.shape_cast %136 : vector<1x1x128xf32> to vector<1x128xf32>
    %138 = vector.broadcast %137 : vector<1x128xf32> to vector<16x128xf32>
    %139 = arith.addf %135, %138 : vector<16x128xf32>
    %140 = arith.addf %85, %139 : vector<16x128xf32>
    %cst_74 = arith.constant 0.000000e+00 : f32
    %141 = vector.broadcast %cst_74 : f32 to vector<16x128xf32>
    %142 = arith.maximumf %31, %141 : vector<16x128xf32>
    %c2_i32 = arith.constant 2 : i32
    %143 = vector.broadcast %c2_i32 : i32 to vector<16x128xi32>
    %144 = arith.cmpi sge, %0, %143 : vector<16x128xi32>
    %c17_i32 = arith.constant 17 : i32
    %145 = vector.broadcast %c17_i32 : i32 to vector<16x128xi32>
    %146 = arith.cmpi sle, %0, %145 : vector<16x128xi32>
    %147 = arith.andi %144, %146 : vector<16x128xi1>
    %c2_i32_75 = arith.constant 2 : i32
    %148 = tpu.dynamic_rotate %142 by %c2_i32_75 dim 0 : vector<16x128xf32>, i32 -> vector<16x128xf32>
    %cst_76 = arith.constant 0.000000e+00 : f32
    %149 = vector.broadcast %cst_76 : f32 to vector<16x128xf32>
    %150 = arith.select %147, %148, %149 : vector<16x128xi1>, vector<16x128xf32>
    %c-2_i32 = arith.constant -2 : i32
    %151 = vector.broadcast %c-2_i32 : i32 to vector<16x128xi32>
    %152 = arith.cmpi sge, %0, %151 : vector<16x128xi32>
    %c13_i32 = arith.constant 13 : i32
    %153 = vector.broadcast %c13_i32 : i32 to vector<16x128xi32>
    %154 = arith.cmpi sle, %0, %153 : vector<16x128xi32>
    %155 = arith.andi %152, %154 : vector<16x128xi1>
    %c14_i32_77 = arith.constant 14 : i32
    %156 = tpu.dynamic_rotate %142 by %c14_i32_77 dim 0 : vector<16x128xf32>, i32 -> vector<16x128xf32>
    %cst_78 = arith.constant 0.000000e+00 : f32
    %157 = vector.broadcast %cst_78 : f32 to vector<16x128xf32>
    %158 = arith.select %155, %156, %157 : vector<16x128xi1>, vector<16x128xf32>
    %159 = tpu.concatenate %150, %142, %158 in 1 : vector<16x128xf32>, vector<16x128xf32>, vector<16x128xf32> -> vector<16x384xf32>
    %c4_79 = arith.constant 4 : index
    %c0_80 = arith.constant 0 : index
    %c0_81 = arith.constant 0 : index
    %160 = vector.load %arg4[%c4_79, %c0_80, %c0_81] : memref<7x384x128xbf16, #tpu.memory_space<vmem>>, vector<1x384x128xbf16>
    %161 = vector.shape_cast %160 : vector<1x384x128xbf16> to vector<384x128xbf16>
    %162 = arith.truncf %159 : vector<16x384xf32> to vector<16x384xbf16>
    %cst_82 = arith.constant dense<0.000000e+00> : vector<16x128xf32>
    %163 = tpu.matmul %162, %161, %cst_82 {dimension_numbers = #tpu.dot_dimension_numbers<[1], [0], [0], [1], [0, 0, 1, 1], [], []>} : vector<16x384xbf16>, vector<384x128xbf16>, vector<16x128xf32> -> vector<16x128xf32>
    %c6 = arith.constant 6 : index
    %c0_83 = arith.constant 0 : index
    %c0_84 = arith.constant 0 : index
    %164 = vector.load %arg5[%c6, %c0_83, %c0_84] : memref<9x1x128xf32, #tpu.memory_space<vmem>>, vector<1x1x128xf32>
    %165 = vector.shape_cast %164 : vector<1x1x128xf32> to vector<1x128xf32>
    %166 = vector.broadcast %165 : vector<1x128xf32> to vector<16x128xf32>
    %167 = arith.addf %163, %166 : vector<16x128xf32>
    %168 = arith.addf %20, %167 : vector<16x128xf32>
    %c8_i32_85 = arith.constant 8 : i32
    %169 = tpu.dynamic_rotate %140 by %c8_i32_85 dim 1 : vector<16x128xf32>, i32 -> vector<16x128xf32>
    %170 = arith.select %7, %169, %140 : vector<16x128xi1>, vector<16x128xf32>
    %c120_i32_86 = arith.constant 120 : i32
    %171 = tpu.dynamic_rotate %140 by %c120_i32_86 dim 1 : vector<16x128xf32>, i32 -> vector<16x128xf32>
    %172 = arith.select %9, %171, %140 : vector<16x128xi1>, vector<16x128xf32>
    %173 = arith.maximumf %170, %172 : vector<16x128xf32>
    %174 = arith.maximumf %140, %173 : vector<16x128xf32>
    %c1_i32_87 = arith.constant 1 : i32
    %175 = tpu.dynamic_rotate %174 by %c1_i32_87 dim 0 : vector<16x128xf32>, i32 -> vector<16x128xf32>
    %176 = arith.select %3, %175, %174 : vector<16x128xi1>, vector<16x128xf32>
    %c15_i32_88 = arith.constant 15 : i32
    %177 = tpu.dynamic_rotate %174 by %c15_i32_88 dim 0 : vector<16x128xf32>, i32 -> vector<16x128xf32>
    %178 = arith.select %5, %177, %174 : vector<16x128xi1>, vector<16x128xf32>
    %179 = arith.maximumf %176, %178 : vector<16x128xf32>
    %180 = arith.maximumf %174, %179 : vector<16x128xf32>
    %181 = arith.addf %180, %20 : vector<16x128xf32>
    %cst_89 = arith.constant 0.000000e+00 : f32
    %182 = vector.broadcast %cst_89 : f32 to vector<16x128xf32>
    %183 = arith.maximumf %168, %182 : vector<16x128xf32>
    %c1_i32_90 = arith.constant 1 : i32
    %184 = vector.broadcast %c1_i32_90 : i32 to vector<16x128xi32>
    %185 = arith.cmpi sge, %0, %184 : vector<16x128xi32>
    %c16_i32_91 = arith.constant 16 : i32
    %186 = vector.broadcast %c16_i32_91 : i32 to vector<16x128xi32>
    %187 = arith.cmpi sle, %0, %186 : vector<16x128xi32>
    %188 = arith.andi %185, %187 : vector<16x128xi1>
    %c1_i32_92 = arith.constant 1 : i32
    %189 = tpu.dynamic_rotate %183 by %c1_i32_92 dim 0 : vector<16x128xf32>, i32 -> vector<16x128xf32>
    %cst_93 = arith.constant 0.000000e+00 : f32
    %190 = vector.broadcast %cst_93 : f32 to vector<16x128xf32>
    %191 = arith.select %188, %189, %190 : vector<16x128xi1>, vector<16x128xf32>
    %c-1_i32_94 = arith.constant -1 : i32
    %192 = vector.broadcast %c-1_i32_94 : i32 to vector<16x128xi32>
    %193 = arith.cmpi sge, %0, %192 : vector<16x128xi32>
    %c14_i32_95 = arith.constant 14 : i32
    %194 = vector.broadcast %c14_i32_95 : i32 to vector<16x128xi32>
    %195 = arith.cmpi sle, %0, %194 : vector<16x128xi32>
    %196 = arith.andi %193, %195 : vector<16x128xi1>
    %c15_i32_96 = arith.constant 15 : i32
    %197 = tpu.dynamic_rotate %183 by %c15_i32_96 dim 0 : vector<16x128xf32>, i32 -> vector<16x128xf32>
    %cst_97 = arith.constant 0.000000e+00 : f32
    %198 = vector.broadcast %cst_97 : f32 to vector<16x128xf32>
    %199 = arith.select %196, %197, %198 : vector<16x128xi1>, vector<16x128xf32>
    %200 = tpu.concatenate %191, %183, %199 in 1 : vector<16x128xf32>, vector<16x128xf32>, vector<16x128xf32> -> vector<16x384xf32>
    %c5_98 = arith.constant 5 : index
    %c0_99 = arith.constant 0 : index
    %c0_100 = arith.constant 0 : index
    %201 = vector.load %arg4[%c5_98, %c0_99, %c0_100] : memref<7x384x128xbf16, #tpu.memory_space<vmem>>, vector<1x384x128xbf16>
    %202 = vector.shape_cast %201 : vector<1x384x128xbf16> to vector<384x128xbf16>
    %203 = arith.truncf %200 : vector<16x384xf32> to vector<16x384xbf16>
    %cst_101 = arith.constant dense<0.000000e+00> : vector<16x128xf32>
    %204 = tpu.matmul %203, %202, %cst_101 {dimension_numbers = #tpu.dot_dimension_numbers<[1], [0], [0], [1], [0, 0, 1, 1], [], []>} : vector<16x384xbf16>, vector<384x128xbf16>, vector<16x128xf32> -> vector<16x128xf32>
    %c7 = arith.constant 7 : index
    %c0_102 = arith.constant 0 : index
    %c0_103 = arith.constant 0 : index
    %205 = vector.load %arg5[%c7, %c0_102, %c0_103] : memref<9x1x128xf32, #tpu.memory_space<vmem>>, vector<1x1x128xf32>
    %206 = vector.shape_cast %205 : vector<1x1x128xf32> to vector<1x128xf32>
    %207 = vector.broadcast %206 : vector<1x128xf32> to vector<16x128xf32>
    %208 = arith.addf %204, %207 : vector<16x128xf32>
    %cst_104 = arith.constant 0.000000e+00 : f32
    %209 = vector.broadcast %cst_104 : f32 to vector<16x128xf32>
    %210 = arith.maximumf %208, %209 : vector<16x128xf32>
    %c1_i32_105 = arith.constant 1 : i32
    %211 = vector.broadcast %c1_i32_105 : i32 to vector<16x128xi32>
    %212 = arith.cmpi sge, %0, %211 : vector<16x128xi32>
    %c16_i32_106 = arith.constant 16 : i32
    %213 = vector.broadcast %c16_i32_106 : i32 to vector<16x128xi32>
    %214 = arith.cmpi sle, %0, %213 : vector<16x128xi32>
    %215 = arith.andi %212, %214 : vector<16x128xi1>
    %c1_i32_107 = arith.constant 1 : i32
    %216 = tpu.dynamic_rotate %210 by %c1_i32_107 dim 0 : vector<16x128xf32>, i32 -> vector<16x128xf32>
    %cst_108 = arith.constant 0.000000e+00 : f32
    %217 = vector.broadcast %cst_108 : f32 to vector<16x128xf32>
    %218 = arith.select %215, %216, %217 : vector<16x128xi1>, vector<16x128xf32>
    %c-1_i32_109 = arith.constant -1 : i32
    %219 = vector.broadcast %c-1_i32_109 : i32 to vector<16x128xi32>
    %220 = arith.cmpi sge, %0, %219 : vector<16x128xi32>
    %c14_i32_110 = arith.constant 14 : i32
    %221 = vector.broadcast %c14_i32_110 : i32 to vector<16x128xi32>
    %222 = arith.cmpi sle, %0, %221 : vector<16x128xi32>
    %223 = arith.andi %220, %222 : vector<16x128xi1>
    %c15_i32_111 = arith.constant 15 : i32
    %224 = tpu.dynamic_rotate %210 by %c15_i32_111 dim 0 : vector<16x128xf32>, i32 -> vector<16x128xf32>
    %cst_112 = arith.constant 0.000000e+00 : f32
    %225 = vector.broadcast %cst_112 : f32 to vector<16x128xf32>
    %226 = arith.select %223, %224, %225 : vector<16x128xi1>, vector<16x128xf32>
    %227 = tpu.concatenate %218, %210, %226 in 1 : vector<16x128xf32>, vector<16x128xf32>, vector<16x128xf32> -> vector<16x384xf32>
    %c6_113 = arith.constant 6 : index
    %c0_114 = arith.constant 0 : index
    %c0_115 = arith.constant 0 : index
    %228 = vector.load %arg4[%c6_113, %c0_114, %c0_115] : memref<7x384x128xbf16, #tpu.memory_space<vmem>>, vector<1x384x128xbf16>
    %229 = vector.shape_cast %228 : vector<1x384x128xbf16> to vector<384x128xbf16>
    %230 = arith.truncf %227 : vector<16x384xf32> to vector<16x384xbf16>
    %cst_116 = arith.constant dense<0.000000e+00> : vector<16x128xf32>
    %231 = tpu.matmul %230, %229, %cst_116 {dimension_numbers = #tpu.dot_dimension_numbers<[1], [0], [0], [1], [0, 0, 1, 1], [], []>} : vector<16x384xbf16>, vector<384x128xbf16>, vector<16x128xf32> -> vector<16x128xf32>
    %c8 = arith.constant 8 : index
    %c0_117 = arith.constant 0 : index
    %c0_118 = arith.constant 0 : index
    %232 = vector.load %arg5[%c8, %c0_117, %c0_118] : memref<9x1x128xf32, #tpu.memory_space<vmem>>, vector<1x1x128xf32>
    %233 = vector.shape_cast %232 : vector<1x1x128xf32> to vector<1x128xf32>
    %234 = vector.broadcast %233 : vector<1x128xf32> to vector<16x128xf32>
    %235 = arith.addf %231, %234 : vector<16x128xf32>
    %c8_i32_119 = arith.constant 8 : i32
    %236 = tpu.dynamic_rotate %31 by %c8_i32_119 dim 1 : vector<16x128xf32>, i32 -> vector<16x128xf32>
    %237 = arith.select %7, %236, %31 : vector<16x128xi1>, vector<16x128xf32>
    %c120_i32_120 = arith.constant 120 : i32
    %238 = tpu.dynamic_rotate %31 by %c120_i32_120 dim 1 : vector<16x128xf32>, i32 -> vector<16x128xf32>
    %239 = arith.select %9, %238, %31 : vector<16x128xi1>, vector<16x128xf32>
    %240 = arith.maximumf %237, %239 : vector<16x128xf32>
    %241 = arith.maximumf %31, %240 : vector<16x128xf32>
    %c1_i32_121 = arith.constant 1 : i32
    %242 = tpu.dynamic_rotate %241 by %c1_i32_121 dim 0 : vector<16x128xf32>, i32 -> vector<16x128xf32>
    %243 = arith.select %3, %242, %241 : vector<16x128xi1>, vector<16x128xf32>
    %c15_i32_122 = arith.constant 15 : i32
    %244 = tpu.dynamic_rotate %241 by %c15_i32_122 dim 0 : vector<16x128xf32>, i32 -> vector<16x128xf32>
    %245 = arith.select %5, %244, %241 : vector<16x128xi1>, vector<16x128xf32>
    %246 = arith.maximumf %243, %245 : vector<16x128xf32>
    %247 = arith.maximumf %241, %246 : vector<16x128xf32>
    %248 = arith.addf %235, %247 : vector<16x128xf32>
    %c0_123 = arith.constant 0 : index
    %c0_124 = arith.constant 0 : index
    %c0_125 = arith.constant 0 : index
    %249 = vector.load %arg6[%c0_123, %c0_124, %c0_125] : memref<4x16x128xf32, #tpu.memory_space<vmem>>, vector<1x16x128xf32>
    %250 = vector.shape_cast %249 : vector<1x16x128xf32> to vector<16x128xf32>
    %251 = vector.shape_cast %140 : vector<16x128xf32> to vector<1x16x128xf32>
    tpu.vector_store %arg6[%c0_123, %c0_124, %c0_125], %251 {strides = array<i32>} : memref<4x16x128xf32, #tpu.memory_space<vmem>>, vector<1x16x128xf32>,
    %c1_126 = arith.constant 1 : index
    %c0_127 = arith.constant 0 : index
    %c0_128 = arith.constant 0 : index
    %252 = vector.load %arg6[%c1_126, %c0_127, %c0_128] : memref<4x16x128xf32, #tpu.memory_space<vmem>>, vector<1x16x128xf32>
    %253 = vector.shape_cast %252 : vector<1x16x128xf32> to vector<16x128xf32>
    %254 = vector.shape_cast %168 : vector<16x128xf32> to vector<1x16x128xf32>
    tpu.vector_store %arg6[%c1_126, %c0_127, %c0_128], %254 {strides = array<i32>} : memref<4x16x128xf32, #tpu.memory_space<vmem>>, vector<1x16x128xf32>,
    %c2_129 = arith.constant 2 : index
    %c0_130 = arith.constant 0 : index
    %c0_131 = arith.constant 0 : index
    %255 = vector.load %arg6[%c2_129, %c0_130, %c0_131] : memref<4x16x128xf32, #tpu.memory_space<vmem>>, vector<1x16x128xf32>
    %256 = vector.shape_cast %255 : vector<1x16x128xf32> to vector<16x128xf32>
    %257 = vector.shape_cast %181 : vector<16x128xf32> to vector<1x16x128xf32>
    tpu.vector_store %arg6[%c2_129, %c0_130, %c0_131], %257 {strides = array<i32>} : memref<4x16x128xf32, #tpu.memory_space<vmem>>, vector<1x16x128xf32>,
    %c3_132 = arith.constant 3 : index
    %c0_133 = arith.constant 0 : index
    %c0_134 = arith.constant 0 : index
    %258 = vector.load %arg6[%c3_132, %c0_133, %c0_134] : memref<4x16x128xf32, #tpu.memory_space<vmem>>, vector<1x16x128xf32>
    %259 = vector.shape_cast %258 : vector<1x16x128xf32> to vector<16x128xf32>
    %260 = vector.shape_cast %248 : vector<16x128xf32> to vector<1x16x128xf32>
    tpu.vector_store %arg6[%c3_132, %c0_133, %c0_134], %260 {strides = array<i32>} : memref<4x16x128xf32, #tpu.memory_space<vmem>>, vector<1x16x128xf32>,
    return
  }
  func.func @transform_0(%arg0: i32) -> (i32, i32) {
    %c0_i32 = arith.constant 0 : i32
    %c0_i32_0 = arith.constant 0 : i32
    return %arg0, %c0_i32 : i32, i32
  }
  func.func @transform_1(%arg0: i32) -> (i32, i32) {
    %c0_i32 = arith.constant 0 : i32
    %c0_i32_0 = arith.constant 0 : i32
    return %arg0, %c0_i32 : i32, i32
  }
  func.func @transform_2(%arg0: i32) -> (i32, i32, i32) {
    %c0_i32 = arith.constant 0 : i32
    %c0_i32_0 = arith.constant 0 : i32
    %c0_i32_1 = arith.constant 0 : i32
    %c0_i32_2 = arith.constant 0 : i32
    return %c0_i32, %c0_i32_0, %c0_i32_1 : i32, i32, i32
  }
  func.func @transform_3(%arg0: i32) -> (i32, i32, i32) {
    %c0_i32 = arith.constant 0 : i32
    %c0_i32_0 = arith.constant 0 : i32
    %c0_i32_1 = arith.constant 0 : i32
    %c0_i32_2 = arith.constant 0 : i32
    return %c0_i32, %c0_i32_0, %c0_i32_1 : i32, i32, i32
  }
  func.func @transform_4(%arg0: i32) -> (i32, i32, i32) {
    %c0_i32 = arith.constant 0 : i32
    %c0_i32_0 = arith.constant 0 : i32
    %c0_i32_1 = arith.constant 0 : i32
    %c0_i32_2 = arith.constant 0 : i32
    return %c0_i32, %c0_i32_0, %c0_i32_1 : i32, i32, i32
  }
  func.func @transform_5(%arg0: i32) -> (i32, i32, i32) {
    %c0_i32 = arith.constant 0 : i32
    %c0_i32_0 = arith.constant 0 : i32
    %c0_i32_1 = arith.constant 0 : i32
    return %c0_i32, %arg0, %c0_i32_0 : i32, i32, i32
  }
}

</mosaic_0001>

<llo_original>
// kernel: cell_forward.1
$region0: #{cell_forward.1}
  #allocation0 [shape = 'u32[]', space=smem, size = 0x4, offset = 0x4, fixed_abs, tag = 'smem constant byte address 0x4 - core index']
  #allocation1 [shape = 'u32[72,128]{1,0:T(1,128)}', space=vmem, size = 0x9000, scoped, tag = 'internal scratch']
  %s0 = inlined_call_operand.vmem [shape: f32[32,128], index: 0, kind: input, shape index: {}]
  %s1 = inlined_call_operand.vmem [shape: f32[32,128], index: 1, kind: input, shape index: {}]
  %s2 = inlined_call_operand.vmem [shape: bf16[2,128,128], index: 2, kind: input, shape index: {}]
  %s3 = inlined_call_operand.hbm [shape: bf16[7,384,128], index: 3, kind: input, shape index: {}]
  %s4 = inlined_call_operand.vmem [shape: f32[9,1,128], index: 4, kind: input, shape index: {}]
  %s5 = inlined_call_operand.vmem [shape: f32[4,32,128], index: 5, kind: output, shape index: {}]
  %s6 = sld [smem:[#allocation0]]
  $region91: #{cell_forward.1} parent=0
    _
  %s8 = ssub.s32 1, %s6
  %s9 = scalar_select 0, %s8, %s6
  $region1: #{cell_forward.1} parent=0
    #allocation2 [shape = 'u8[688128]{0}', space=vmem, size = 0xa8000, scoped, tag = 'input window, operand 3, single buffered']
    #allocation3 [shape = 's32[2]{0}', space=sflag, size = 0x8, scoped, tag = 'scoped memory for cell_forward.1']
    #allocation4 [shape = 'u8[65536]{0}', space=vmem, size = 0x10000, scoped, tag = 'output window, operand 0']
    %10 = vsyncpa [#allocation3], 0
    loop: start=0, step=1, limit=4
    $region2: #{cell_forward.1} parent=1 // loop_pre_header
      _
    $region3: #{cell_forward.1} parent=1 // loop_header
      %s12 = sphi 0, %s16
      %p13 = scmp.ge.s32.totalorder %s12, 4
      %s22 = sphi 0, %s24
      %s25 = sphi 0, %s22
      %s26 = sphi 0, %s25
      %s42 = sphi 0, %s26
      %s48 = sphi 0, %s50
      %s51 = sphi 0, %s48
      %s52 = sphi 0, %s51
      %s68 = sphi 0, %s52
      %s72 = sphi 0, %s72
      %s74 = sphi 0, %s72
      %s75 = sphi 0, %s74
      %s89 = sphi 0, %s75
      %s93 = sphi 0, %s93
      %s95 = sphi 0, %s93
      %s96 = sphi 0, %s95
      %s110 = sphi 0, %s96
      %s114 = sphi 0, %s114
      %s116 = sphi 0, %s114
      %s117 = sphi 0, %s116
      %s131 = sphi 0, %s117
      %s137 = sphi 0, %s139
      %s140 = sphi 0, %s137
      %s141 = sphi 0, %s140
      %s157 = sphi 0, %s141
    $region4: #{cell_forward.1} parent=1 // loop_header_branch
      %15 = sbr.rel (%p13) target = $region8
    $region5: #{cell_forward.1} parent=1 // loop_body
      %s17 = ssub.s32 %s12, 1
      %s18 = ssub.s32 %s12, 2
      %s19 = sadd.s32 %s12, 1
      %s20 = ssub.s32 %s12, %s19
      %p21 = scmp.eq.s32.totalorder %s20, 0
      %s23 = sadd.s32 %s22, 1
      %s24 = scalar_select %p21, %s22, %s23
      %p27 = pneg %p21
      %p28 = scmp.eq.s32.totalorder %s12, 1
      %p29 = por %p27, %p28
      %p30 = scmp.ne.s32.totalorder %s22, %s25
      %p31 = scmp.eq.s32.totalorder %s12, 0
      %p32 = por %p30, %p31
      %p33 = scmp.ne.s32.totalorder %s22, %s25
      %p34 = scmp.eq.s32.totalorder %s17, 1
      %p35 = por %p33, %p34
      %p36 = scmp.ne.s32.totalorder %s25, %s26
      %p37 = scmp.eq.s32.totalorder %s17, 0
      %p38 = por %p36, %p37
      %p39 = scmp.ne.s32.totalorder %s25, %s26
      %p40 = scmp.eq.s32.totalorder %s18, 1
      %p41 = por %p39, %p40
      %p43 = scmp.ne.s32.totalorder %s26, %s42
      %p44 = scmp.eq.s32.totalorder %s18, 0
      %p45 = por %p43, %p44
      %s46 = ssub.s32 %s12, %s19
      %p47 = scmp.eq.s32.totalorder %s46, 0
      %s49 = sadd.s32 %s48, 1
      %s50 = scalar_select %p47, %s48, %s49
      %p53 = pneg %p47
      %p54 = scmp.eq.s32.totalorder %s12, 1
      %p55 = por %p53, %p54
      %p56 = scmp.ne.s32.totalorder %s48, %s51
      %p57 = scmp.eq.s32.totalorder %s12, 0
      %p58 = por %p56, %p57
      %p59 = scmp.ne.s32.totalorder %s48, %s51
      %p60 = scmp.eq.s32.totalorder %s17, 1
      %p61 = por %p59, %p60
      %p62 = scmp.ne.s32.totalorder %s51, %s52
      %p63 = scmp.eq.s32.totalorder %s17, 0
      %p64 = por %p62, %p63
      %p65 = scmp.ne.s32.totalorder %s51, %s52
      %p66 = scmp.eq.s32.totalorder %s18, 1
      %p67 = por %p65, %p66
      %p69 = scmp.ne.s32.totalorder %s52, %s68
      %p70 = scmp.eq.s32.totalorder %s18, 0
      %p71 = por %p69, %p70
      %s73 = sadd.s32 %s72, 1
      %p76 = scmp.eq.s32.totalorder %s12, 1
      %p77 = scmp.ne.s32.totalorder %s72, %s74
      %p78 = scmp.eq.s32.totalorder %s12, 0
      %p79 = por %p77, %p78
      %p80 = scmp.ne.s32.totalorder %s72, %s74
      %p81 = scmp.eq.s32.totalorder %s17, 1
      %p82 = por %p80, %p81
      %p83 = scmp.ne.s32.totalorder %s74, %s75
      %p84 = scmp.eq.s32.totalorder %s17, 0
      %p85 = por %p83, %p84
      %p86 = scmp.ne.s32.totalorder %s74, %s75
      %p87 = scmp.eq.s32.totalorder %s18, 1
      %p88 = por %p86, %p87
      %p90 = scmp.ne.s32.totalorder %s75, %s89
      %p91 = scmp.eq.s32.totalorder %s18, 0
      %p92 = por %p90, %p91
      %s94 = sadd.s32 %s93, 1
      %p97 = scmp.eq.s32.totalorder %s12, 1
      %p98 = scmp.ne.s32.totalorder %s93, %s95
      %p99 = scmp.eq.s32.totalorder %s12, 0
      %p100 = por %p98, %p99
      %p101 = scmp.ne.s32.totalorder %s93, %s95
      %p102 = scmp.eq.s32.totalorder %s17, 1
      %p103 = por %p101, %p102
      %p104 = scmp.ne.s32.totalorder %s95, %s96
      %p105 = scmp.eq.s32.totalorder %s17, 0
      %p106 = por %p104, %p105
      %p107 = scmp.ne.s32.totalorder %s95, %s96
      %p108 = scmp.eq.s32.totalorder %s18, 1
      %p109 = por %p107, %p108
      %p111 = scmp.ne.s32.totalorder %s96, %s110
      %p112 = scmp.eq.s32.totalorder %s18, 0
      %p113 = por %p111, %p112
      %s115 = sadd.s32 %s114, 1
      %p118 = scmp.eq.s32.totalorder %s12, 1
      %p119 = scmp.ne.s32.totalorder %s114, %s116
      %p120 = scmp.eq.s32.totalorder %s12, 0
      %p121 = por %p119, %p120
      %p122 = scmp.ne.s32.totalorder %s114, %s116
      %p123 = scmp.eq.s32.totalorder %s17, 1
      %p124 = por %p122, %p123
      %p125 = scmp.ne.s32.totalorder %s116, %s117
      %p126 = scmp.eq.s32.totalorder %s17, 0
      %p127 = por %p125, %p126
      %p128 = scmp.ne.s32.totalorder %s116, %s117
      %p129 = scmp.eq.s32.totalorder %s18, 1
      %p130 = por %p128, %p129
      %p132 = scmp.ne.s32.totalorder %s117, %s131
      %p133 = scmp.eq.s32.totalorder %s18, 0
      %p134 = por %p132, %p133
      %s135 = ssub.s32 %s12, %s19
      %p136 = scmp.eq.s32.totalorder %s135, 0
      %s138 = sadd.s32 %s137, 1
      %s139 = scalar_select %p136, %s137, %s138
      %p142 = pneg %p136
      %p143 = scmp.eq.s32.totalorder %s12, 1
      %p144 = por %p142, %p143
      %p145 = scmp.ne.s32.totalorder %s137, %s140
      %p146 = scmp.eq.s32.totalorder %s12, 0
      %p147 = por %p145, %p146
      %p148 = scmp.ne.s32.totalorder %s137, %s140
      %p149 = scmp.eq.s32.totalorder %s17, 1
      %p150 = por %p148, %p149
      %p151 = scmp.ne.s32.totalorder %s140, %s141
      %p152 = scmp.eq.s32.totalorder %s17, 0
      %p153 = por %p151, %p152
      %p154 = scmp.ne.s32.totalorder %s140, %s141
      %p155 = scmp.eq.s32.totalorder %s18, 1
      %p156 = por %p154, %p155
      %p158 = scmp.ne.s32.totalorder %s141, %s157
      %p159 = scmp.eq.s32.totalorder %s18, 0
      %p160 = por %p158, %p159
      %p161 = scmp.le.s32.totalorder 1, %s12
      %p162 = scmp.lt.s32.totalorder %s12, 3
      %p163 = pnand %p161, %p162
      %p164 = pneg %p163
      // Predicated region
      $region9: #{cell_forward.1} parent=5 // pred_check
        _
      $region10: #{cell_forward.1} parent=5 // pred_check_branch
        %166 = sbr.rel (%p163) target = $region12
      $region11: #{cell_forward.1} parent=5 // pred_region
        %s167 = ssub.s32 %s12, 1
        // Predicated region
        $region13: #{cell_forward.1} parent=11 // pred_check
          %p168 = pneg %p85
        $region14: #{cell_forward.1} parent=11 // pred_check_branch
          %170 = sbr.rel (%p168) target = $region16
        $region15: #{cell_forward.1} parent=11 // pred_region
          _
        $region16: #{cell_forward.1} parent=11 // pred_fallthru
          _
        // Predicated region
        $region17: #{cell_forward.1} parent=11 // pred_check
          %p171 = pneg %p106
        $region18: #{cell_forward.1} parent=11 // pred_check_branch
          %173 = sbr.rel (%p171) target = $region20
        $region19: #{cell_forward.1} parent=11 // pred_region
          %175 = vsyncadd [#allocation3], 0
          %s176 = sshll.u32 %s3, 4
          %s177 = int_to_ptr.hbm [resolvable:$true] %s176
          %s178 = sshll.u32 [#allocation2], 4
          %s179 = int_to_ptr.vmem [resolvable:$true] %s178
          %184 = dma.hbm_to_vmem [thread:$0]  %s177, 21504, %s179, [#allocation3], 64, 64, 4
        $region20: #{cell_forward.1} parent=11 // pred_fallthru
          _
        // Predicated region
        $region21: #{cell_forward.1} parent=11 // pred_check
          %p185 = pneg %p127
        $region22: #{cell_forward.1} parent=11 // pred_check_branch
          %187 = sbr.rel (%p185) target = $region24
        $region23: #{cell_forward.1} parent=11 // pred_region
          _
        $region24: #{cell_forward.1} parent=11 // pred_fallthru
          _
      $region12: #{cell_forward.1} parent=5 // pred_fallthru
        _
      %p188 = scmp.lt.s32.totalorder %s12, 2
      // Predicated region
      $region25: #{cell_forward.1} parent=5 // pred_check
        %p189 = pneg %p188
      $region26: #{cell_forward.1} parent=5 // pred_check_branch
        %191 = sbr.rel (%p189) target = $region28
      $region27: #{cell_forward.1} parent=5 // pred_region
        // Predicated region
        $region29: #{cell_forward.1} parent=27 // pred_check
          %p192 = pneg %p32
        $region30: #{cell_forward.1} parent=27 // pred_check_branch
          %194 = sbr.rel (%p192) target = $region32
        $region31: #{cell_forward.1} parent=27 // pred_region
          %s195 = smul.u32 2, %s12
          %p196 = scmp.lt.s32.totalorder %s195, 3
          %s197 = scalar_select %p196, %s195, 3
          %s198 = smul.addr %s197, 8
          %s199 = scalar_lea.vmem %s0, %s198
          %s200 = smul.u32 2, %s12
        $region32: #{cell_forward.1} parent=27 // pred_fallthru
          _
        // Predicated region
        $region33: #{cell_forward.1} parent=27 // pred_check
          %p201 = pneg %p58
        $region34: #{cell_forward.1} parent=27 // pred_check_branch
          %203 = sbr.rel (%p201) target = $region36
        $region35: #{cell_forward.1} parent=27 // pred_region
          %s204 = smul.u32 2, %s12
          %p205 = scmp.lt.s32.totalorder %s204, 3
          %s206 = scalar_select %p205, %s204, 3
          %s207 = smul.addr %s206, 8
          %s208 = scalar_lea.vmem %s1, %s207
          %s209 = smul.u32 2, %s12
        $region36: #{cell_forward.1} parent=27 // pred_fallthru
          _
      $region28: #{cell_forward.1} parent=5 // pred_fallthru
        _
      %p210 = scmp.le.s32.totalorder 1, %s12
      %p211 = scmp.lt.s32.totalorder %s12, 3
      %p212 = pnand %p210, %p211
      %p213 = pneg %p212
      // Predicated region
      $region37: #{cell_forward.1} parent=5 // pred_check
        _
      $region38: #{cell_forward.1} parent=5 // pred_check_branch
        %215 = sbr.rel (%p212) target = $region40
      $region39: #{cell_forward.1} parent=5 // pred_region
        %s216 = ssub.s32 %s12, 1
        // Predicated region
        $region41: #{cell_forward.1} parent=39 // pred_check
          %p217 = pneg %p106
        $region42: #{cell_forward.1} parent=39 // pred_check_branch
          %219 = sbr.rel (%p217) target = $region44
        $region43: #{cell_forward.1} parent=39 // pred_region
          %221 = dma.done [#allocation3], 21504
        $region44: #{cell_forward.1} parent=39 // pred_fallthru
          _
        %s222 = smul.u32 2, %s17
        %p223 = scmp.lt.s32.totalorder %s222, 3
        %s224 = scalar_select %p223, %s222, 3
        %s225 = smul.addr %s224, 8
        %s226 = scalar_lea.vmem %s0, %s225
        %p227 = pneg %p38
        %p228 = pneg %p35
        %s229 = smul.u32 2, %s17
        %p230 = scmp.lt.s32.totalorder %s229, 3
        %s231 = scalar_select %p230, %s229, 3
        %s232 = smul.addr %s231, 8
        %s233 = scalar_lea.vmem %s1, %s232
        %p234 = pneg %p64
        %p235 = pneg %p61
        %p236 = pneg %p85
        %p237 = pneg %p82
        %p238 = pneg %p106
        %p239 = pneg %p103
        %p240 = pneg %p127
        %p241 = pneg %p124
        %p242 = pneg %p153
        %p243 = pneg %p150
        %s244 = sand.u32 %s140, 1
        %s245 = sand.u32 %s140, 1
        %s246 = smul.addr %s245, 64
        %s247 = scalar_lea.vmem [#allocation4], %s246
        %s248 = smul.u32 2, %s17
        %p249 = scmp.lt.s32.totalorder %s248, 3
        %s250 = scalar_select %p249, %s248, 3
        %s251 = smul.addr %s250, 8
        %s252 = scalar_lea.vmem %s0, %s251
        %s253 = smul.u32 2, %s17
        %s254 = smul.u32 2, %s17
        %p255 = scmp.lt.s32.totalorder %s254, 3
        %s256 = scalar_select %p255, %s254, 3
        %s257 = smul.addr %s256, 8
        %s258 = scalar_lea.vmem %s1, %s257
        %s259 = smul.u32 2, %s17
        %s260 = smul.u32 2, %s17
        %v261 = vlaneseq
        %v262 = vshrl.u32 %v261, 7
        %v263 = vadd.s32 %v262, 8
        %v264 = vlaneseq
        %v265 = vand.u32 %v264, 127
        %vm266 = vcmp.ge.s32.totalorder %v262, 1
        %vm267 = vcmp.ge.s32.totalorder %v263, 1
        %vm268 = vcmp.le.s32.totalorder %v262, 14
        %vm269 = vcmp.le.s32.totalorder %v263, 14
        %vm270 = vcmp.ge.s32.totalorder %v265, 8
        %vm271 = vcmp.lt.s32.totalorder %v265, 120
        %v272 = vld [vmem:[%s252] sm:$0xff]
        %v273 = vld [vmem:[%s252 + $0x8] sm:$0xff]
        %v274 = vmax.f32 %v272, 0.0
        %v275 = vmax.f32 %v273, 0.0
        %v276 = vld [vmem:[%s2] sm:$0xf]
        %v277 = vld [vmem:[%s2 + $0x4] sm:$0xf]
        %v278 = vld [vmem:[%s2 + $0x8] sm:$0xf]
        %v279 = vld [vmem:[%s2 + $0xc] sm:$0xf]
        %v280 = vld [vmem:[%s2 + $0x10] sm:$0xf]
        %v281 = vld [vmem:[%s2 + $0x14] sm:$0xf]
        %v282 = vld [vmem:[%s2 + $0x18] sm:$0xf]
        %v283 = vld [vmem:[%s2 + $0x1c] sm:$0xf]
        %v284 = vld [vmem:[%s2 + $0x20] sm:$0xf]
        %v285 = vld [vmem:[%s2 + $0x24] sm:$0xf]
        %v286 = vld [vmem:[%s2 + $0x28] sm:$0xf]
        %v287 = vld [vmem:[%s2 + $0x2c] sm:$0xf]
        %v288 = vld [vmem:[%s2 + $0x30] sm:$0xf]
        %v289 = vld [vmem:[%s2 + $0x34] sm:$0xf]
        %v290 = vld [vmem:[%s2 + $0x38] sm:$0xf]
        %v291 = vld [vmem:[%s2 + $0x3c] sm:$0xf]
        %v292 = vpack.c.bf16 %v275, %v274
        %v293 = vld [vmem:[%s4] sm:$0x1]
        %v295 = vperm.slane %v293, 0
        %v313 = vunpack.c.l.b16 %v276
        %v314 = vunpack.c.l.b16 %v277
        %v315 = vunpack.c.l.b16 %v278
        %v316 = vunpack.c.l.b16 %v279
        %v317 = vunpack.c.l.b16 %v280
        %v318 = vunpack.c.l.b16 %v281
        %v319 = vunpack.c.l.b16 %v282
        %v320 = vunpack.c.l.b16 %v283
        %v321 = vunpack.c.l.b16 %v284
        %v322 = vunpack.c.l.b16 %v285
        %v323 = vunpack.c.l.b16 %v286
        %v324 = vunpack.c.l.b16 %v287
        %v325 = vunpack.c.l.b16 %v288
        %v326 = vunpack.c.l.b16 %v289
        %v327 = vunpack.c.l.b16 %v290
        %v328 = vunpack.c.l.b16 %v291
        %v329 = vpack.c.b16 %v314, %v313
        %v330 = vpack.c.b16 %v316, %v315
        %v331 = vpack.c.b16 %v318, %v317
        %v332 = vpack.c.b16 %v320, %v319
        %v333 = vpack.c.b16 %v322, %v321
        %v334 = vpack.c.b16 %v324, %v323
        %v335 = vpack.c.b16 %v326, %v325
        %v336 = vpack.c.b16 %v328, %v327
        %345 = vmatpush.bf16.msra.mxu0 %v336
        %346 = vmatpush.bf16.msra.mxu0 %v335
        %347 = vmatpush.bf16.msra.mxu0 %v334
        %348 = vmatpush.bf16.msra.mxu0 %v333
        %349 = vmatpush.bf16.msra.mxu0 %v332
        %350 = vmatpush.bf16.msra.mxu0 %v331
        %351 = vmatpush.bf16.msra.mxu0 %v330
        %352 = vmatpush.bf16.msra.mxu0 %v329
        %353 = vmatmul.bf16.gmra.mxu0 %v292
        %v354 = vpop.f32.mrf.mxu0
        %v355 = vadd.f32 %v295, %v354
        %v356 = vpop.f32.mrf.mxu0
        %v357 = vadd.f32 %v295, %v356
        %358 = vdwg.mxu0
        %v359 = vld [vmem:[%s258] sm:$0xff]
        %v360 = vld [vmem:[%s258 + $0x8] sm:$0xff]
        %v361 = vmax.f32 %v359, 0.0
        %v362 = vmax.f32 %v360, 0.0
        %s363 = scalar_lea.vmem %s2, 64
        %v364 = vld [vmem:[%s363] sm:$0xf]
        %v365 = vld [vmem:[%s363 + $0x4] sm:$0xf]
        %v366 = vld [vmem:[%s363 + $0x8] sm:$0xf]
        %v367 = vld [vmem:[%s363 + $0xc] sm:$0xf]
        %v368 = vld [vmem:[%s363 + $0x10] sm:$0xf]
        %v369 = vld [vmem:[%s363 + $0x14] sm:$0xf]
        %v370 = vld [vmem:[%s363 + $0x18] sm:$0xf]
        %v371 = vld [vmem:[%s363 + $0x1c] sm:$0xf]
        %v372 = vld [vmem:[%s363 + $0x20] sm:$0xf]
        %v373 = vld [vmem:[%s363 + $0x24] sm:$0xf]
        %v374 = vld [vmem:[%s363 + $0x28] sm:$0xf]
        %v375 = vld [vmem:[%s363 + $0x2c] sm:$0xf]
        %v376 = vld [vmem:[%s363 + $0x30] sm:$0xf]
        %v377 = vld [vmem:[%s363 + $0x34] sm:$0xf]
        %v378 = vld [vmem:[%s363 + $0x38] sm:$0xf]
        %v379 = vld [vmem:[%s363 + $0x3c] sm:$0xf]
        %v380 = vpack.c.bf16 %v362, %v361
        %s381 = scalar_lea.vmem %s4, 1
        %v382 = vld [vmem:[%s381] sm:$0x1]
        %v384 = vperm.slane %v382, 0
        %v402 = vunpack.c.l.b16 %v364
        %v403 = vunpack.c.l.b16 %v365
        %v404 = vunpack.c.l.b16 %v366
        %v405 = vunpack.c.l.b16 %v367
        %v406 = vunpack.c.l.b16 %v368
        %v407 = vunpack.c.l.b16 %v369
        %v408 = vunpack.c.l.b16 %v370
        %v409 = vunpack.c.l.b16 %v371
        %v410 = vunpack.c.l.b16 %v372
        %v411 = vunpack.c.l.b16 %v373
        %v412 = vunpack.c.l.b16 %v374
        %v413 = vunpack.c.l.b16 %v375
        %v414 = vunpack.c.l.b16 %v376
        %v415 = vunpack.c.l.b16 %v377
        %v416 = vunpack.c.l.b16 %v378
        %v417 = vunpack.c.l.b16 %v379
        %v418 = vpack.c.b16 %v403, %v402
        %v419 = vpack.c.b16 %v405, %v404
        %v420 = vpack.c.b16 %v407, %v406
        %v421 = vpack.c.b16 %v409, %v408
        %v422 = vpack.c.b16 %v411, %v410
        %v423 = vpack.c.b16 %v413, %v412
        %v424 = vpack.c.b16 %v415, %v414
        %v425 = vpack.c.b16 %v417, %v416
        %434 = vmatpush.bf16.msra.mxu0 %v425
        %435 = vmatpush.bf16.msra.mxu0 %v424
        %436 = vmatpush.bf16.msra.mxu0 %v423
        %437 = vmatpush.bf16.msra.mxu0 %v422
        %438 = vmatpush.bf16.msra.mxu0 %v421
        %439 = vmatpush.bf16.msra.mxu0 %v420
        %440 = vmatpush.bf16.msra.mxu0 %v419
        %441 = vmatpush.bf16.msra.mxu0 %v418
        %442 = vmatmul.bf16.gmra.mxu0 %v380
        %v443 = vpop.f32.mrf.mxu0
        %v444 = vadd.f32 %v384, %v443
        %v445 = vpop.f32.mrf.mxu0
        %v446 = vadd.f32 %v384, %v445
        %447 = vdwg.mxu0
        %v448 = vmax.f32 %v355, 0.0
        %v449 = vmax.f32 %v357, 0.0
        %vm450 = vcmp.le.s32.totalorder %v262, 16
        %vm451 = vcmp.le.s32.totalorder %v263, 16
        %vm452 = vmand %vm266, %vm450
        %vm453 = vmand %vm267, %vm451
        %v454 = vrot.slane %v448, 7
        %v455 = vrot.slane %v449, 7
        %vm456 = vcmp.lt.s32.totalorder %v262, 1
        %v457 = vsel %vm456, %v454, %v455
        %v458 = vsel %vm456, %v455, %v454
        %v459 = vsel %vm452, %v458, 0.0
        %v460 = vsel %vm453, %v457, 0.0
        %vm461 = vcmp.ge.s32.totalorder %v262, 4294967295
        %vm462 = vcmp.ge.s32.totalorder %v263, 4294967295
        %vm463 = vmand %vm461, %vm268
        %vm464 = vmand %vm462, %vm269
        %v465 = vrot.slane %v448, 1
        %v466 = vrot.slane %v449, 1
        %vm467 = vcmp.lt.s32.totalorder %v262, 7
        %v468 = vsel %vm467, %v465, %v466
        %v469 = vsel %vm467, %v466, %v465
        %v470 = vsel %vm463, %v468, 0.0
        %v471 = vsel %vm464, %v469, 0.0
        %v472 = vld [vmem:[#allocation2] sm:$0xf]
        %v473 = vld [vmem:[#allocation2 + $0x4] sm:$0xf]
        %v474 = vld [vmem:[#allocation2 + $0x8] sm:$0xf]
        %v475 = vld [vmem:[#allocation2 + $0xc] sm:$0xf]
        %v476 = vld [vmem:[#allocation2 + $0x10] sm:$0xf]
        %v477 = vld [vmem:[#allocation2 + $0x14] sm:$0xf]
        %v478 = vld [vmem:[#allocation2 + $0x18] sm:$0xf]
        %v479 = vld [vmem:[#allocation2 + $0x1c] sm:$0xf]
        %v480 = vld [vmem:[#allocation2 + $0x20] sm:$0xf]
        %v481 = vld [vmem:[#allocation2 + $0x24] sm:$0xf]
        %v482 = vld [vmem:[#allocation2 + $0x28] sm:$0xf]
        %v483 = vld [vmem:[#allocation2 + $0x2c] sm:$0xf]
        %v484 = vld [vmem:[#allocation2 + $0x30] sm:$0xf]
        %v485 = vld [vmem:[#allocation2 + $0x34] sm:$0xf]
        %v486 = vld [vmem:[#allocation2 + $0x38] sm:$0xf]
        %v487 = vld [vmem:[#allocation2 + $0x3c] sm:$0xf]
        %v488 = vld [vmem:[#allocation2 + $0x40] sm:$0xf]
        %v489 = vld [vmem:[#allocation2 + $0x44] sm:$0xf]
        %v490 = vld [vmem:[#allocation2 + $0x48] sm:$0xf]
        %v491 = vld [vmem:[#allocation2 + $0x4c] sm:$0xf]
        %v492 = vld [vmem:[#allocation2 + $0x50] sm:$0xf]
        %v493 = vld [vmem:[#allocation2 + $0x54] sm:$0xf]
        %v494 = vld [vmem:[#allocation2 + $0x58] sm:$0xf]
        %v495 = vld [vmem:[#allocation2 + $0x5c] sm:$0xf]
        %v496 = vld [vmem:[#allocation2 + $0x60] sm:$0xf]
        %v497 = vld [vmem:[#allocation2 + $0x64] sm:$0xf]
        %v498 = vld [vmem:[#allocation2 + $0x68] sm:$0xf]
        %v499 = vld [vmem:[#allocation2 + $0x6c] sm:$0xf]
        %v500 = vld [vmem:[#allocation2 + $0x70] sm:$0xf]
        %v501 = vld [vmem:[#allocation2 + $0x74] sm:$0xf]
        %v502 = vld [vmem:[#allocation2 + $0x78] sm:$0xf]
        %v503 = vld [vmem:[#allocation2 + $0x7c] sm:$0xf]
        %v504 = vld [vmem:[#allocation2 + $0x80] sm:$0xf]
        %v505 = vld [vmem:[#allocation2 + $0x84] sm:$0xf]
        %v506 = vld [vmem:[#allocation2 + $0x88] sm:$0xf]
        %v507 = vld [vmem:[#allocation2 + $0x8c] sm:$0xf]
        %v508 = vld [vmem:[#allocation2 + $0x90] sm:$0xf]
        %v509 = vld [vmem:[#allocation2 + $0x94] sm:$0xf]
        %v510 = vld [vmem:[#allocation2 + $0x98] sm:$0xf]
        %v511 = vld [vmem:[#allocation2 + $0x9c] sm:$0xf]
        %v512 = vld [vmem:[#allocation2 + $0xa0] sm:$0xf]
        %v513 = vld [vmem:[#allocation2 + $0xa4] sm:$0xf]
        %v514 = vld [vmem:[#allocation2 + $0xa8] sm:$0xf]
        %v515 = vld [vmem:[#allocation2 + $0xac] sm:$0xf]
        %v516 = vld [vmem:[#allocation2 + $0xb0] sm:$0xf]
        %v517 = vld [vmem:[#allocation2 + $0xb4] sm:$0xf]
        %v518 = vld [vmem:[#allocation2 + $0xb8] sm:$0xf]
        %v519 = vld [vmem:[#allocation2 + $0xbc] sm:$0xf]
        %v520 = vpack.c.bf16 %v460, %v459
        %v521 = vpack.c.bf16 %v449, %v448
        %v522 = vpack.c.bf16 %v471, %v470
        %s523 = scalar_lea.vmem %s4, 2
        %v524 = vld [vmem:[%s523] sm:$0x1]
        %v526 = vperm.slane %v524, 0
        %v576 = vunpack.c.l.b16 %v472
        %v577 = vunpack.c.l.b16 %v473
        %v578 = vunpack.c.l.b16 %v474
        %v579 = vunpack.c.l.b16 %v475
        %v580 = vunpack.c.l.b16 %v476
        %v581 = vunpack.c.l.b16 %v477
        %v582 = vunpack.c.l.b16 %v478
        %v583 = vunpack.c.l.b16 %v479
        %v584 = vunpack.c.l.b16 %v480
        %v585 = vunpack.c.l.b16 %v481
        %v586 = vunpack.c.l.b16 %v482
        %v587 = vunpack.c.l.b16 %v483
        %v588 = vunpack.c.l.b16 %v484
        %v589 = vunpack.c.l.b16 %v485
        %v590 = vunpack.c.l.b16 %v486
        %v591 = vunpack.c.l.b16 %v487
        %v592 = vunpack.c.l.b16 %v488
        %v593 = vunpack.c.l.b16 %v489
        %v594 = vunpack.c.l.b16 %v490
        %v595 = vunpack.c.l.b16 %v491
        %v596 = vunpack.c.l.b16 %v492
        %v597 = vunpack.c.l.b16 %v493
        %v598 = vunpack.c.l.b16 %v494
        %v599 = vunpack.c.l.b16 %v495
        %v600 = vunpack.c.l.b16 %v496
        %v601 = vunpack.c.l.b16 %v497
        %v602 = vunpack.c.l.b16 %v498
        %v603 = vunpack.c.l.b16 %v499
        %v604 = vunpack.c.l.b16 %v500
        %v605 = vunpack.c.l.b16 %v501
        %v606 = vunpack.c.l.b16 %v502
        %v607 = vunpack.c.l.b16 %v503
        %v608 = vunpack.c.l.b16 %v504
        %v609 = vunpack.c.l.b16 %v505
        %v610 = vunpack.c.l.b16 %v506
        %v611 = vunpack.c.l.b16 %v507
        %v612 = vunpack.c.l.b16 %v508
        %v613 = vunpack.c.l.b16 %v509
        %v614 = vunpack.c.l.b16 %v510
        %v615 = vunpack.c.l.b16 %v511
        %v616 = vunpack.c.l.b16 %v512
        %v617 = vunpack.c.l.b16 %v513
        %v618 = vunpack.c.l.b16 %v514
        %v619 = vunpack.c.l.b16 %v515
        %v620 = vunpack.c.l.b16 %v516
        %v621 = vunpack.c.l.b16 %v517
        %v622 = vunpack.c.l.b16 %v518
        %v623 = vunpack.c.l.b16 %v519
        %v624 = vpack.c.b16 %v577, %v576
        %v625 = vpack.c.b16 %v579, %v578
        %v626 = vpack.c.b16 %v581, %v580
        %v627 = vpack.c.b16 %v583, %v582
        %v628 = vpack.c.b16 %v585, %v584
        %v629 = vpack.c.b16 %v587, %v586
        %v630 = vpack.c.b16 %v589, %v588
        %v631 = vpack.c.b16 %v591, %v590
        %v632 = vpack.c.b16 %v593, %v592
        %v633 = vpack.c.b16 %v595, %v594
        %v634 = vpack.c.b16 %v597, %v596
        %v635 = vpack.c.b16 %v599, %v598
        %v636 = vpack.c.b16 %v601, %v600
        %v637 = vpack.c.b16 %v603, %v602
        %v638 = vpack.c.b16 %v605, %v604
        %v639 = vpack.c.b16 %v607, %v606
        %v640 = vpack.c.b16 %v609, %v608
        %v641 = vpack.c.b16 %v611, %v610
        %v642 = vpack.c.b16 %v613, %v612
        %v643 = vpack.c.b16 %v615, %v614
        %v644 = vpack.c.b16 %v617, %v616
        %v645 = vpack.c.b16 %v619, %v618
        %v646 = vpack.c.b16 %v621, %v620
        %v647 = vpack.c.b16 %v623, %v622
        %672 = vmatpush.bf16.msra.mxu0 %v631
        %673 = vmatpush.bf16.msra.mxu0 %v630
        %674 = vmatpush.bf16.msra.mxu0 %v629
        %675 = vmatpush.bf16.msra.mxu0 %v628
        %676 = vmatpush.bf16.msra.mxu0 %v627
        %677 = vmatpush.bf16.msra.mxu0 %v626
        %678 = vmatpush.bf16.msra.mxu0 %v625
        %679 = vmatpush.bf16.msra.mxu0 %v624
        %680 = vmatmul.bf16.gmra.mxu0 %v520
        %v681 = vpop.f32.mrf.mxu0
        %v682 = vadd.f32 %v526, %v681
        %v683 = vpop.f32.mrf.mxu0
        %v684 = vadd.f32 %v526, %v683
        %685 = vdwg.mxu0
        %686 = vmatpush.bf16.msra.mxu0 %v639
        %687 = vmatpush.bf16.msra.mxu0 %v638
        %688 = vmatpush.bf16.msra.mxu0 %v637
        %689 = vmatpush.bf16.msra.mxu0 %v636
        %690 = vmatpush.bf16.msra.mxu0 %v635
        %691 = vmatpush.bf16.msra.mxu0 %v634
        %692 = vmatpush.bf16.msra.mxu0 %v633
        %693 = vmatpush.bf16.msra.mxu0 %v632
        %694 = vmatmul.bf16.gmra.mxu0 %v521
        %v695 = vpop.f32.mrf.mxu0
        %v696 = vadd.f32 %v682, %v695
        %v697 = vpop.f32.mrf.mxu0
        %v698 = vadd.f32 %v684, %v697
        %699 = vdwg.mxu0
        %700 = vmatpush.bf16.msra.mxu0 %v647
        %701 = vmatpush.bf16.msra.mxu0 %v646
        %702 = vmatpush.bf16.msra.mxu0 %v645
        %703 = vmatpush.bf16.msra.mxu0 %v644
        %704 = vmatpush.bf16.msra.mxu0 %v643
        %705 = vmatpush.bf16.msra.mxu0 %v642
        %706 = vmatpush.bf16.msra.mxu0 %v641
        %707 = vmatpush.bf16.msra.mxu0 %v640
        %708 = vmatmul.bf16.gmra.mxu0 %v522
        %v709 = vpop.f32.mrf.mxu0
        %v710 = vadd.f32 %v696, %v709
        %v711 = vpop.f32.mrf.mxu0
        %v712 = vadd.f32 %v698, %v711
        %713 = vdwg.mxu0
        %v714 = vmax.f32 %v710, 0.0
        %v715 = vmax.f32 %v712, 0.0
        %v716 = vrot.slane %v714, 7
        %v717 = vrot.slane %v715, 7
        %v718 = vsel %vm456, %v716, %v717
        %v719 = vsel %vm456, %v717, %v716
        %v720 = vsel %vm452, %v719, 0.0
        %v721 = vsel %vm453, %v718, 0.0
        %v722 = vrot.slane %v714, 1
        %v723 = vrot.slane %v715, 1
        %v724 = vsel %vm467, %v722, %v723
        %v725 = vsel %vm467, %v723, %v722
        %v726 = vsel %vm463, %v724, 0.0
        %v727 = vsel %vm464, %v725, 0.0
        %s728 = scalar_lea.vmem [#allocation2], 192
        %v729 = vld [vmem:[%s728] sm:$0xf]
        %v730 = vld [vmem:[%s728 + $0x4] sm:$0xf]
        %v731 = vld [vmem:[%s728 + $0x8] sm:$0xf]
        %v732 = vld [vmem:[%s728 + $0xc] sm:$0xf]
        %v733 = vld [vmem:[%s728 + $0x10] sm:$0xf]
        %v734 = vld [vmem:[%s728 + $0x14] sm:$0xf]
        %v735 = vld [vmem:[%s728 + $0x18] sm:$0xf]
        %v736 = vld [vmem:[%s728 + $0x1c] sm:$0xf]
        %v737 = vld [vmem:[%s728 + $0x20] sm:$0xf]
        %v738 = vld [vmem:[%s728 + $0x24] sm:$0xf]
        %v739 = vld [vmem:[%s728 + $0x28] sm:$0xf]
        %v740 = vld [vmem:[%s728 + $0x2c] sm:$0xf]
        %v741 = vld [vmem:[%s728 + $0x30] sm:$0xf]
        %v742 = vld [vmem:[%s728 + $0x34] sm:$0xf]
        %v743 = vld [vmem:[%s728 + $0x38] sm:$0xf]
        %v744 = vld [vmem:[%s728 + $0x3c] sm:$0xf]
        %v745 = vld [vmem:[%s728 + $0x40] sm:$0xf]
        %v746 = vld [vmem:[%s728 + $0x44] sm:$0xf]
        %v747 = vld [vmem:[%s728 + $0x48] sm:$0xf]
        %v748 = vld [vmem:[%s728 + $0x4c] sm:$0xf]
        %v749 = vld [vmem:[%s728 + $0x50] sm:$0xf]
        %v750 = vld [vmem:[%s728 + $0x54] sm:$0xf]
        %v751 = vld [vmem:[%s728 + $0x58] sm:$0xf]
        %v752 = vld [vmem:[%s728 + $0x5c] sm:$0xf]
        %v753 = vld [vmem:[%s728 + $0x60] sm:$0xf]
        %v754 = vld [vmem:[%s728 + $0x64] sm:$0xf]
        %v755 = vld [vmem:[%s728 + $0x68] sm:$0xf]
        %v756 = vld [vmem:[%s728 + $0x6c] sm:$0xf]
        %v757 = vld [vmem:[%s728 + $0x70] sm:$0xf]
        %v758 = vld [vmem:[%s728 + $0x74] sm:$0xf]
        %v759 = vld [vmem:[%s728 + $0x78] sm:$0xf]
        %v760 = vld [vmem:[%s728 + $0x7c] sm:$0xf]
        %v761 = vld [vmem:[%s728 + $0x80] sm:$0xf]
        %v762 = vld [vmem:[%s728 + $0x84] sm:$0xf]
        %v763 = vld [vmem:[%s728 + $0x88] sm:$0xf]
        %v764 = vld [vmem:[%s728 + $0x8c] sm:$0xf]
        %v765 = vld [vmem:[%s728 + $0x90] sm:$0xf]
        %v766 = vld [vmem:[%s728 + $0x94] sm:$0xf]
        %v767 = vld [vmem:[%s728 + $0x98] sm:$0xf]
        %v768 = vld [vmem:[%s728 + $0x9c] sm:$0xf]
        %v769 = vld [vmem:[%s728 + $0xa0] sm:$0xf]
        %v770 = vld [vmem:[%s728 + $0xa4] sm:$0xf]
        %v771 = vld [vmem:[%s728 + $0xa8] sm:$0xf]
        %v772 = vld [vmem:[%s728 + $0xac] sm:$0xf]
        %v773 = vld [vmem:[%s728 + $0xb0] sm:$0xf]
        %v774 = vld [vmem:[%s728 + $0xb4] sm:$0xf]
        %v775 = vld [vmem:[%s728 + $0xb8] sm:$0xf]
        %v776 = vld [vmem:[%s728 + $0xbc] sm:$0xf]
        %v777 = vpack.c.bf16 %v721, %v720
        %v778 = vpack.c.bf16 %v715, %v714
        %v779 = vpack.c.bf16 %v727, %v726
        %s780 = scalar_lea.vmem %s4, 3
        %v781 = vld [vmem:[%s780] sm:$0x1]
        %v783 = vperm.slane %v781, 0
        %v833 = vunpack.c.l.b16 %v729
        %v834 = vunpack.c.l.b16 %v730
        %v835 = vunpack.c.l.b16 %v731
        %v836 = vunpack.c.l.b16 %v732
        %v837 = vunpack.c.l.b16 %v733
        %v838 = vunpack.c.l.b16 %v734
        %v839 = vunpack.c.l.b16 %v735
        %v840 = vunpack.c.l.b16 %v736
        %v841 = vunpack.c.l.b16 %v737
        %v842 = vunpack.c.l.b16 %v738
        %v843 = vunpack.c.l.b16 %v739
        %v844 = vunpack.c.l.b16 %v740
        %v845 = vunpack.c.l.b16 %v741
        %v846 = vunpack.c.l.b16 %v742
        %v847 = vunpack.c.l.b16 %v743
        %v848 = vunpack.c.l.b16 %v744
        %v849 = vunpack.c.l.b16 %v745
        %v850 = vunpack.c.l.b16 %v746
        %v851 = vunpack.c.l.b16 %v747
        %v852 = vunpack.c.l.b16 %v748
        %v853 = vunpack.c.l.b16 %v749
        %v854 = vunpack.c.l.b16 %v750
        %v855 = vunpack.c.l.b16 %v751
        %v856 = vunpack.c.l.b16 %v752
        %v857 = vunpack.c.l.b16 %v753
        %v858 = vunpack.c.l.b16 %v754
        %v859 = vunpack.c.l.b16 %v755
        %v860 = vunpack.c.l.b16 %v756
        %v861 = vunpack.c.l.b16 %v757
        %v862 = vunpack.c.l.b16 %v758
        %v863 = vunpack.c.l.b16 %v759
        %v864 = vunpack.c.l.b16 %v760
        %v865 = vunpack.c.l.b16 %v761
        %v866 = vunpack.c.l.b16 %v762
        %v867 = vunpack.c.l.b16 %v763
        %v868 = vunpack.c.l.b16 %v764
        %v869 = vunpack.c.l.b16 %v765
        %v870 = vunpack.c.l.b16 %v766
        %v871 = vunpack.c.l.b16 %v767
        %v872 = vunpack.c.l.b16 %v768
        %v873 = vunpack.c.l.b16 %v769
        %v874 = vunpack.c.l.b16 %v770
        %v875 = vunpack.c.l.b16 %v771
        %v876 = vunpack.c.l.b16 %v772
        %v877 = vunpack.c.l.b16 %v773
        %v878 = vunpack.c.l.b16 %v774
        %v879 = vunpack.c.l.b16 %v775
        %v880 = vunpack.c.l.b16 %v776
        %v881 = vpack.c.b16 %v834, %v833
        %v882 = vpack.c.b16 %v836, %v835
        %v883 = vpack.c.b16 %v838, %v837
        %v884 = vpack.c.b16 %v840, %v839
        %v885 = vpack.c.b16 %v842, %v841
        %v886 = vpack.c.b16 %v844, %v843
        %v887 = vpack.c.b16 %v846, %v845
        %v888 = vpack.c.b16 %v848, %v847
        %v889 = vpack.c.b16 %v850, %v849
        %v890 = vpack.c.b16 %v852, %v851
        %v891 = vpack.c.b16 %v854, %v853
        %v892 = vpack.c.b16 %v856, %v855
        %v893 = vpack.c.b16 %v858, %v857
        %v894 = vpack.c.b16 %v860, %v859
        %v895 = vpack.c.b16 %v862, %v861
        %v896 = vpack.c.b16 %v864, %v863
        %v897 = vpack.c.b16 %v866, %v865
        %v898 = vpack.c.b16 %v868, %v867
        %v899 = vpack.c.b16 %v870, %v869
        %v900 = vpack.c.b16 %v872, %v871
        %v901 = vpack.c.b16 %v874, %v873
        %v902 = vpack.c.b16 %v876, %v875
        %v903 = vpack.c.b16 %v878, %v877
        %v904 = vpack.c.b16 %v880, %v879
        %929 = vmatpush.bf16.msra.mxu0 %v888
        %930 = vmatpush.bf16.msra.mxu0 %v887
        %931 = vmatpush.bf16.msra.mxu0 %v886
        %932 = vmatpush.bf16.msra.mxu0 %v885
        %933 = vmatpush.bf16.msra.mxu0 %v884
        %934 = vmatpush.bf16.msra.mxu0 %v883
        %935 = vmatpush.bf16.msra.mxu0 %v882
        %936 = vmatpush.bf16.msra.mxu0 %v881
        %937 = vmatmul.bf16.gmra.mxu0 %v777
        %v938 = vpop.f32.mrf.mxu0
        %v939 = vadd.f32 %v783, %v938
        %v940 = vpop.f32.mrf.mxu0
        %v941 = vadd.f32 %v783, %v940
        %942 = vdwg.mxu0
        %943 = vmatpush.bf16.msra.mxu0 %v896
        %944 = vmatpush.bf16.msra.mxu0 %v895
        %945 = vmatpush.bf16.msra.mxu0 %v894
        %946 = vmatpush.bf16.msra.mxu0 %v893
        %947 = vmatpush.bf16.msra.mxu0 %v892
        %948 = vmatpush.bf16.msra.mxu0 %v891
        %949 = vmatpush.bf16.msra.mxu0 %v890
        %950 = vmatpush.bf16.msra.mxu0 %v889
        %951 = vmatmul.bf16.gmra.mxu0 %v778
        %v952 = vpop.f32.mrf.mxu0
        %v953 = vadd.f32 %v939, %v952
        %v954 = vpop.f32.mrf.mxu0
        %v955 = vadd.f32 %v941, %v954
        %956 = vdwg.mxu0
        %957 = vmatpush.bf16.msra.mxu0 %v904
        %958 = vmatpush.bf16.msra.mxu0 %v903
        %959 = vmatpush.bf16.msra.mxu0 %v902
        %960 = vmatpush.bf16.msra.mxu0 %v901
        %961 = vmatpush.bf16.msra.mxu0 %v900
        %962 = vmatpush.bf16.msra.mxu0 %v899
        %963 = vmatpush.bf16.msra.mxu0 %v898
        %964 = vmatpush.bf16.msra.mxu0 %v897
        %965 = vmatmul.bf16.gmra.mxu0 %v779
        %v966 = vpop.f32.mrf.mxu0
        %v967 = vadd.f32 %v953, %v966
        %v968 = vpop.f32.mrf.mxu0
        %v969 = vadd.f32 %v955, %v968
        %970 = vdwg.mxu0
        %v971 = vmax.f32 %v444, 0.0
        %v972 = vmax.f32 %v446, 0.0
        %v973 = vrot.slane %v971, 7
        %v974 = vrot.slane %v972, 7
        %v975 = vsel %vm456, %v973, %v974
        %v976 = vsel %vm456, %v974, %v973
        %v977 = vsel %vm452, %v976, 0.0
        %v978 = vsel %vm453, %v975, 0.0
        %v979 = vrot.slane %v971, 1
        %v980 = vrot.slane %v972, 1
        %v981 = vsel %vm467, %v979, %v980
        %v982 = vsel %vm467, %v980, %v979
        %v983 = vsel %vm463, %v981, 0.0
        %v984 = vsel %vm464, %v982, 0.0
        %s985 = scalar_lea.vmem [#allocation2], 384
        %v986 = vld [vmem:[%s985] sm:$0xf]
        %v987 = vld [vmem:[%s985 + $0x4] sm:$0xf]
        %v988 = vld [vmem:[%s985 + $0x8] sm:$0xf]
        %v989 = vld [vmem:[%s985 + $0xc] sm:$0xf]
        %v990 = vld [vmem:[%s985 + $0x10] sm:$0xf]
        %v991 = vld [vmem:[%s985 + $0x14] sm:$0xf]
        %v992 = vld [vmem:[%s985 + $0x18] sm:$0xf]
        %v993 = vld [vmem:[%s985 + $0x1c] sm:$0xf]
        %v994 = vld [vmem:[%s985 + $0x20] sm:$0xf]
        %v995 = vld [vmem:[%s985 + $0x24] sm:$0xf]
        %v996 = vld [vmem:[%s985 + $0x28] sm:$0xf]
        %v997 = vld [vmem:[%s985 + $0x2c] sm:$0xf]
        %v998 = vld [vmem:[%s985 + $0x30] sm:$0xf]
        %v999 = vld [vmem:[%s985 + $0x34] sm:$0xf]
        %v1000 = vld [vmem:[%s985 + $0x38] sm:$0xf]
        %v1001 = vld [vmem:[%s985 + $0x3c] sm:$0xf]
        %v1002 = vld [vmem:[%s985 + $0x40] sm:$0xf]
        %v1003 = vld [vmem:[%s985 + $0x44] sm:$0xf]
        %v1004 = vld [vmem:[%s985 + $0x48] sm:$0xf]
        %v1005 = vld [vmem:[%s985 + $0x4c] sm:$0xf]
        %v1006 = vld [vmem:[%s985 + $0x50] sm:$0xf]
        %v1007 = vld [vmem:[%s985 + $0x54] sm:$0xf]
        %v1008 = vld [vmem:[%s985 + $0x58] sm:$0xf]
        %v1009 = vld [vmem:[%s985 + $0x5c] sm:$0xf]
        %v1010 = vld [vmem:[%s985 + $0x60] sm:$0xf]
        %v1011 = vld [vmem:[%s985 + $0x64] sm:$0xf]
        %v1012 = vld [vmem:[%s985 + $0x68] sm:$0xf]
        %v1013 = vld [vmem:[%s985 + $0x6c] sm:$0xf]
        %v1014 = vld [vmem:[%s985 + $0x70] sm:$0xf]
        %v1015 = vld [vmem:[%s985 + $0x74] sm:$0xf]
        %v1016 = vld [vmem:[%s985 + $0x78] sm:$0xf]
        %v1017 = vld [vmem:[%s985 + $0x7c] sm:$0xf]
        %v1018 = vld [vmem:[%s985 + $0x80] sm:$0xf]
        %v1019 = vld [vmem:[%s985 + $0x84] sm:$0xf]
        %v1020 = vld [vmem:[%s985 + $0x88] sm:$0xf]
        %v1021 = vld [vmem:[%s985 + $0x8c] sm:$0xf]
        %v1022 = vld [vmem:[%s985 + $0x90] sm:$0xf]
        %v1023 = vld [vmem:[%s985 + $0x94] sm:$0xf]
        %v1024 = vld [vmem:[%s985 + $0x98] sm:$0xf]
        %v1025 = vld [vmem:[%s985 + $0x9c] sm:$0xf]
        %v1026 = vld [vmem:[%s985 + $0xa0] sm:$0xf]
        %v1027 = vld [vmem:[%s985 + $0xa4] sm:$0xf]
        %v1028 = vld [vmem:[%s985 + $0xa8] sm:$0xf]
        %v1029 = vld [vmem:[%s985 + $0xac] sm:$0xf]
        %v1030 = vld [vmem:[%s985 + $0xb0] sm:$0xf]
        %v1031 = vld [vmem:[%s985 + $0xb4] sm:$0xf]
        %v1032 = vld [vmem:[%s985 + $0xb8] sm:$0xf]
        %v1033 = vld [vmem:[%s985 + $0xbc] sm:$0xf]
        %v1034 = vpack.c.bf16 %v978, %v977
        %v1035 = vpack.c.bf16 %v972, %v971
        %v1036 = vpack.c.bf16 %v984, %v983
        %s1037 = scalar_lea.vmem %s4, 4
        %v1038 = vld [vmem:[%s1037] sm:$0x1]
        %v1040 = vperm.slane %v1038, 0
        %v1090 = vunpack.c.l.b16 %v986
        %v1091 = vunpack.c.l.b16 %v987
        %v1092 = vunpack.c.l.b16 %v988
        %v1093 = vunpack.c.l.b16 %v989
        %v1094 = vunpack.c.l.b16 %v990
        %v1095 = vunpack.c.l.b16 %v991
        %v1096 = vunpack.c.l.b16 %v992
        %v1097 = vunpack.c.l.b16 %v993
        %v1098 = vunpack.c.l.b16 %v994
        %v1099 = vunpack.c.l.b16 %v995
        %v1100 = vunpack.c.l.b16 %v996
        %v1101 = vunpack.c.l.b16 %v997
        %v1102 = vunpack.c.l.b16 %v998
        %v1103 = vunpack.c.l.b16 %v999
        %v1104 = vunpack.c.l.b16 %v1000
        %v1105 = vunpack.c.l.b16 %v1001
        %v1106 = vunpack.c.l.b16 %v1002
        %v1107 = vunpack.c.l.b16 %v1003
        %v1108 = vunpack.c.l.b16 %v1004
        %v1109 = vunpack.c.l.b16 %v1005
        %v1110 = vunpack.c.l.b16 %v1006
        %v1111 = vunpack.c.l.b16 %v1007
        %v1112 = vunpack.c.l.b16 %v1008
        %v1113 = vunpack.c.l.b16 %v1009
        %v1114 = vunpack.c.l.b16 %v1010
        %v1115 = vunpack.c.l.b16 %v1011
        %v1116 = vunpack.c.l.b16 %v1012
        %v1117 = vunpack.c.l.b16 %v1013
        %v1118 = vunpack.c.l.b16 %v1014
        %v1119 = vunpack.c.l.b16 %v1015
        %v1120 = vunpack.c.l.b16 %v1016
        %v1121 = vunpack.c.l.b16 %v1017
        %v1122 = vunpack.c.l.b16 %v1018
        %v1123 = vunpack.c.l.b16 %v1019
        %v1124 = vunpack.c.l.b16 %v1020
        %v1125 = vunpack.c.l.b16 %v1021
        %v1126 = vunpack.c.l.b16 %v1022
        %v1127 = vunpack.c.l.b16 %v1023
        %v1128 = vunpack.c.l.b16 %v1024
        %v1129 = vunpack.c.l.b16 %v1025
        %v1130 = vunpack.c.l.b16 %v1026
        %v1131 = vunpack.c.l.b16 %v1027
        %v1132 = vunpack.c.l.b16 %v1028
        %v1133 = vunpack.c.l.b16 %v1029
        %v1134 = vunpack.c.l.b16 %v1030
        %v1135 = vunpack.c.l.b16 %v1031
        %v1136 = vunpack.c.l.b16 %v1032
        %v1137 = vunpack.c.l.b16 %v1033
        %v1138 = vpack.c.b16 %v1091, %v1090
        %v1139 = vpack.c.b16 %v1093, %v1092
        %v1140 = vpack.c.b16 %v1095, %v1094
        %v1141 = vpack.c.b16 %v1097, %v1096
        %v1142 = vpack.c.b16 %v1099, %v1098
        %v1143 = vpack.c.b16 %v1101, %v1100
        %v1144 = vpack.c.b16 %v1103, %v1102
        %v1145 = vpack.c.b16 %v1105, %v1104
        %v1146 = vpack.c.b16 %v1107, %v1106
        %v1147 = vpack.c.b16 %v1109, %v1108
        %v1148 = vpack.c.b16 %v1111, %v1110
        %v1149 = vpack.c.b16 %v1113, %v1112
        %v1150 = vpack.c.b16 %v1115, %v1114
        %v1151 = vpack.c.b16 %v1117, %v1116
        %v1152 = vpack.c.b16 %v1119, %v1118
        %v1153 = vpack.c.b16 %v1121, %v1120
        %v1154 = vpack.c.b16 %v1123, %v1122
        %v1155 = vpack.c.b16 %v1125, %v1124
        %v1156 = vpack.c.b16 %v1127, %v1126
        %v1157 = vpack.c.b16 %v1129, %v1128
        %v1158 = vpack.c.b16 %v1131, %v1130
        %v1159 = vpack.c.b16 %v1133, %v1132
        %v1160 = vpack.c.b16 %v1135, %v1134
        %v1161 = vpack.c.b16 %v1137, %v1136
        %1186 = vmatpush.bf16.msra.mxu0 %v1145
        %1187 = vmatpush.bf16.msra.mxu0 %v1144
        %1188 = vmatpush.bf16.msra.mxu0 %v1143
        %1189 = vmatpush.bf16.msra.mxu0 %v1142
        %1190 = vmatpush.bf16.msra.mxu0 %v1141
        %1191 = vmatpush.bf16.msra.mxu0 %v1140
        %1192 = vmatpush.bf16.msra.mxu0 %v1139
        %1193 = vmatpush.bf16.msra.mxu0 %v1138
        %1194 = vmatmul.bf16.gmra.mxu0 %v1034
        %v1195 = vpop.f32.mrf.mxu0
        %v1196 = vadd.f32 %v1040, %v1195
        %v1197 = vpop.f32.mrf.mxu0
        %v1198 = vadd.f32 %v1040, %v1197
        %1199 = vdwg.mxu0
        %1200 = vmatpush.bf16.msra.mxu0 %v1153
        %1201 = vmatpush.bf16.msra.mxu0 %v1152
        %1202 = vmatpush.bf16.msra.mxu0 %v1151
        %1203 = vmatpush.bf16.msra.mxu0 %v1150
        %1204 = vmatpush.bf16.msra.mxu0 %v1149
        %1205 = vmatpush.bf16.msra.mxu0 %v1148
        %1206 = vmatpush.bf16.msra.mxu0 %v1147
        %1207 = vmatpush.bf16.msra.mxu0 %v1146
        %1208 = vmatmul.bf16.gmra.mxu0 %v1035
        %v1209 = vpop.f32.mrf.mxu0
        %v1210 = vadd.f32 %v1196, %v1209
        %v1211 = vpop.f32.mrf.mxu0
        %v1212 = vadd.f32 %v1198, %v1211
        %1213 = vdwg.mxu0
        %1214 = vmatpush.bf16.msra.mxu0 %v1161
        %1215 = vmatpush.bf16.msra.mxu0 %v1160
        %1216 = vmatpush.bf16.msra.mxu0 %v1159
        %1217 = vmatpush.bf16.msra.mxu0 %v1158
        %1218 = vmatpush.bf16.msra.mxu0 %v1157
        %1219 = vmatpush.bf16.msra.mxu0 %v1156
        %1220 = vmatpush.bf16.msra.mxu0 %v1155
        %1221 = vmatpush.bf16.msra.mxu0 %v1154
        %1222 = vmatmul.bf16.gmra.mxu0 %v1036
        %v1223 = vpop.f32.mrf.mxu0
        %v1224 = vadd.f32 %v1210, %v1223
        %v1225 = vpop.f32.mrf.mxu0
        %v1226 = vadd.f32 %v1212, %v1225
        %1227 = vdwg.mxu0
        %v1228 = vmax.f32 %v1224, 0.0
        %v1229 = vmax.f32 %v1226, 0.0
        %v1230 = vrot.slane %v1228, 7
        %v1231 = vrot.slane %v1229, 7
        %v1232 = vsel %vm456, %v1230, %v1231
        %v1233 = vsel %vm456, %v1231, %v1230
        %v1234 = vsel %vm452, %v1233, 0.0
        %v1235 = vsel %vm453, %v1232, 0.0
        %v1236 = vrot.slane %v1228, 1
        %v1237 = vrot.slane %v1229, 1
        %v1238 = vsel %vm467, %v1236, %v1237
        %v1239 = vsel %vm467, %v1237, %v1236
        %v1240 = vsel %vm463, %v1238, 0.0
        %v1241 = vsel %vm464, %v1239, 0.0
        %s1242 = scalar_lea.vmem [#allocation2], 576
        %v1243 = vld [vmem:[%s1242] sm:$0xf]
        %v1244 = vld [vmem:[%s1242 + $0x4] sm:$0xf]
        %v1245 = vld [vmem:[%s1242 + $0x8] sm:$0xf]
        %v1246 = vld [vmem:[%s1242 + $0xc] sm:$0xf]
        %v1247 = vld [vmem:[%s1242 + $0x10] sm:$0xf]
        %v1248 = vld [vmem:[%s1242 + $0x14] sm:$0xf]
        %v1249 = vld [vmem:[%s1242 + $0x18] sm:$0xf]
        %v1250 = vld [vmem:[%s1242 + $0x1c] sm:$0xf]
        %v1251 = vld [vmem:[%s1242 + $0x20] sm:$0xf]
        %v1252 = vld [vmem:[%s1242 + $0x24] sm:$0xf]
        %v1253 = vld [vmem:[%s1242 + $0x28] sm:$0xf]
        %v1254 = vld [vmem:[%s1242 + $0x2c] sm:$0xf]
        %v1255 = vld [vmem:[%s1242 + $0x30] sm:$0xf]
        %v1256 = vld [vmem:[%s1242 + $0x34] sm:$0xf]
        %v1257 = vld [vmem:[%s1242 + $0x38] sm:$0xf]
        %v1258 = vld [vmem:[%s1242 + $0x3c] sm:$0xf]
        %v1259 = vld [vmem:[%s1242 + $0x40] sm:$0xf]
        %v1260 = vld [vmem:[%s1242 + $0x44] sm:$0xf]
        %v1261 = vld [vmem:[%s1242 + $0x48] sm:$0xf]
        %v1262 = vld [vmem:[%s1242 + $0x4c] sm:$0xf]
        %v1263 = vld [vmem:[%s1242 + $0x50] sm:$0xf]
        %v1264 = vld [vmem:[%s1242 + $0x54] sm:$0xf]
        %v1265 = vld [vmem:[%s1242 + $0x58] sm:$0xf]
        %v1266 = vld [vmem:[%s1242 + $0x5c] sm:$0xf]
        %v1267 = vld [vmem:[%s1242 + $0x60] sm:$0xf]
        %v1268 = vld [vmem:[%s1242 + $0x64] sm:$0xf]
        %v1269 = vld [vmem:[%s1242 + $0x68] sm:$0xf]
        %v1270 = vld [vmem:[%s1242 + $0x6c] sm:$0xf]
        %v1271 = vld [vmem:[%s1242 + $0x70] sm:$0xf]
        %v1272 = vld [vmem:[%s1242 + $0x74] sm:$0xf]
        %v1273 = vld [vmem:[%s1242 + $0x78] sm:$0xf]
        %v1274 = vld [vmem:[%s1242 + $0x7c] sm:$0xf]
        %v1275 = vld [vmem:[%s1242 + $0x80] sm:$0xf]
        %v1276 = vld [vmem:[%s1242 + $0x84] sm:$0xf]
        %v1277 = vld [vmem:[%s1242 + $0x88] sm:$0xf]
        %v1278 = vld [vmem:[%s1242 + $0x8c] sm:$0xf]
        %v1279 = vld [vmem:[%s1242 + $0x90] sm:$0xf]
        %v1280 = vld [vmem:[%s1242 + $0x94] sm:$0xf]
        %v1281 = vld [vmem:[%s1242 + $0x98] sm:$0xf]
        %v1282 = vld [vmem:[%s1242 + $0x9c] sm:$0xf]
        %v1283 = vld [vmem:[%s1242 + $0xa0] sm:$0xf]
        %v1284 = vld [vmem:[%s1242 + $0xa4] sm:$0xf]
        %v1285 = vld [vmem:[%s1242 + $0xa8] sm:$0xf]
        %v1286 = vld [vmem:[%s1242 + $0xac] sm:$0xf]
        %v1287 = vld [vmem:[%s1242 + $0xb0] sm:$0xf]
        %v1288 = vld [vmem:[%s1242 + $0xb4] sm:$0xf]
        %v1289 = vld [vmem:[%s1242 + $0xb8] sm:$0xf]
        %v1290 = vld [vmem:[%s1242 + $0xbc] sm:$0xf]
        %v1291 = vpack.c.bf16 %v1235, %v1234
        %v1292 = vpack.c.bf16 %v1229, %v1228
        %v1293 = vpack.c.bf16 %v1241, %v1240
        %s1294 = scalar_lea.vmem %s4, 5
        %v1295 = vld [vmem:[%s1294] sm:$0x1]
        %v1297 = vperm.slane %v1295, 0
        %v1347 = vunpack.c.l.b16 %v1243
        %v1348 = vunpack.c.l.b16 %v1244
        %v1349 = vunpack.c.l.b16 %v1245
        %v1350 = vunpack.c.l.b16 %v1246
        %v1351 = vunpack.c.l.b16 %v1247
        %v1352 = vunpack.c.l.b16 %v1248
        %v1353 = vunpack.c.l.b16 %v1249
        %v1354 = vunpack.c.l.b16 %v1250
        %v1355 = vunpack.c.l.b16 %v1251
        %v1356 = vunpack.c.l.b16 %v1252
        %v1357 = vunpack.c.l.b16 %v1253
        %v1358 = vunpack.c.l.b16 %v1254
        %v1359 = vunpack.c.l.b16 %v1255
        %v1360 = vunpack.c.l.b16 %v1256
        %v1361 = vunpack.c.l.b16 %v1257
        %v1362 = vunpack.c.l.b16 %v1258
        %v1363 = vunpack.c.l.b16 %v1259
        %v1364 = vunpack.c.l.b16 %v1260
        %v1365 = vunpack.c.l.b16 %v1261
        %v1366 = vunpack.c.l.b16 %v1262
        %v1367 = vunpack.c.l.b16 %v1263
        %v1368 = vunpack.c.l.b16 %v1264
        %v1369 = vunpack.c.l.b16 %v1265
        %v1370 = vunpack.c.l.b16 %v1266
        %v1371 = vunpack.c.l.b16 %v1267
        %v1372 = vunpack.c.l.b16 %v1268
        %v1373 = vunpack.c.l.b16 %v1269
        %v1374 = vunpack.c.l.b16 %v1270
        %v1375 = vunpack.c.l.b16 %v1271
        %v1376 = vunpack.c.l.b16 %v1272
        %v1377 = vunpack.c.l.b16 %v1273
        %v1378 = vunpack.c.l.b16 %v1274
        %v1379 = vunpack.c.l.b16 %v1275
        %v1380 = vunpack.c.l.b16 %v1276
        %v1381 = vunpack.c.l.b16 %v1277
        %v1382 = vunpack.c.l.b16 %v1278
        %v1383 = vunpack.c.l.b16 %v1279
        %v1384 = vunpack.c.l.b16 %v1280
        %v1385 = vunpack.c.l.b16 %v1281
        %v1386 = vunpack.c.l.b16 %v1282
        %v1387 = vunpack.c.l.b16 %v1283
        %v1388 = vunpack.c.l.b16 %v1284
        %v1389 = vunpack.c.l.b16 %v1285
        %v1390 = vunpack.c.l.b16 %v1286
        %v1391 = vunpack.c.l.b16 %v1287
        %v1392 = vunpack.c.l.b16 %v1288
        %v1393 = vunpack.c.l.b16 %v1289
        %v1394 = vunpack.c.l.b16 %v1290
        %v1395 = vpack.c.b16 %v1348, %v1347
        %v1396 = vpack.c.b16 %v1350, %v1349
        %v1397 = vpack.c.b16 %v1352, %v1351
        %v1398 = vpack.c.b16 %v1354, %v1353
        %v1399 = vpack.c.b16 %v1356, %v1355
        %v1400 = vpack.c.b16 %v1358, %v1357
        %v1401 = vpack.c.b16 %v1360, %v1359
        %v1402 = vpack.c.b16 %v1362, %v1361
        %v1403 = vpack.c.b16 %v1364, %v1363
        %v1404 = vpack.c.b16 %v1366, %v1365
        %v1405 = vpack.c.b16 %v1368, %v1367
        %v1406 = vpack.c.b16 %v1370, %v1369
        %v1407 = vpack.c.b16 %v1372, %v1371
        %v1408 = vpack.c.b16 %v1374, %v1373
        %v1409 = vpack.c.b16 %v1376, %v1375
        %v1410 = vpack.c.b16 %v1378, %v1377
        %v1411 = vpack.c.b16 %v1380, %v1379
        %v1412 = vpack.c.b16 %v1382, %v1381
        %v1413 = vpack.c.b16 %v1384, %v1383
        %v1414 = vpack.c.b16 %v1386, %v1385
        %v1415 = vpack.c.b16 %v1388, %v1387
        %v1416 = vpack.c.b16 %v1390, %v1389
        %v1417 = vpack.c.b16 %v1392, %v1391
        %v1418 = vpack.c.b16 %v1394, %v1393
        %1443 = vmatpush.bf16.msra.mxu0 %v1402
        %1444 = vmatpush.bf16.msra.mxu0 %v1401
        %1445 = vmatpush.bf16.msra.mxu0 %v1400
        %1446 = vmatpush.bf16.msra.mxu0 %v1399
        %1447 = vmatpush.bf16.msra.mxu0 %v1398
        %1448 = vmatpush.bf16.msra.mxu0 %v1397
        %1449 = vmatpush.bf16.msra.mxu0 %v1396
        %1450 = vmatpush.bf16.msra.mxu0 %v1395
        %1451 = vmatmul.bf16.gmra.mxu0 %v1291
        %v1452 = vpop.f32.mrf.mxu0
        %v1453 = vadd.f32 %v1297, %v1452
        %v1454 = vpop.f32.mrf.mxu0
        %v1455 = vadd.f32 %v1297, %v1454
        %1456 = vdwg.mxu0
        %1457 = vmatpush.bf16.msra.mxu0 %v1410
        %1458 = vmatpush.bf16.msra.mxu0 %v1409
        %1459 = vmatpush.bf16.msra.mxu0 %v1408
        %1460 = vmatpush.bf16.msra.mxu0 %v1407
        %1461 = vmatpush.bf16.msra.mxu0 %v1406
        %1462 = vmatpush.bf16.msra.mxu0 %v1405
        %1463 = vmatpush.bf16.msra.mxu0 %v1404
        %1464 = vmatpush.bf16.msra.mxu0 %v1403
        %1465 = vmatmul.bf16.gmra.mxu0 %v1292
        %v1466 = vpop.f32.mrf.mxu0
        %v1467 = vadd.f32 %v1453, %v1466
        %v1468 = vpop.f32.mrf.mxu0
        %v1469 = vadd.f32 %v1455, %v1468
        %1470 = vdwg.mxu0
        %1471 = vmatpush.bf16.msra.mxu0 %v1418
        %1472 = vmatpush.bf16.msra.mxu0 %v1417
        %1473 = vmatpush.bf16.msra.mxu0 %v1416
        %1474 = vmatpush.bf16.msra.mxu0 %v1415
        %1475 = vmatpush.bf16.msra.mxu0 %v1414
        %1476 = vmatpush.bf16.msra.mxu0 %v1413
        %1477 = vmatpush.bf16.msra.mxu0 %v1412
        %1478 = vmatpush.bf16.msra.mxu0 %v1411
        %1479 = vmatmul.bf16.gmra.mxu0 %v1293
        %v1480 = vpop.f32.mrf.mxu0
        %v1481 = vadd.f32 %v1467, %v1480
        %v1482 = vpop.f32.mrf.mxu0
        %v1483 = vadd.f32 %v1469, %v1482
        %1484 = vdwg.mxu0
        %v1485 = vadd.f32 %v967, %v1481
        %v1486 = vadd.f32 %v969, %v1483
        %vm1487 = vcmp.ge.s32.totalorder %v262, 2
        %vm1488 = vcmp.ge.s32.totalorder %v263, 2
        %vm1489 = vcmp.le.s32.totalorder %v262, 17
        %vm1490 = vcmp.le.s32.totalorder %v263, 17
        %vm1491 = vmand %vm1487, %vm1489
        %vm1492 = vmand %vm1488, %vm1490
        %v1493 = vrot.slane %v971, 6
        %v1494 = vrot.slane %v972, 6
        %vm1495 = vcmp.lt.s32.totalorder %v262, 2
        %v1496 = vsel %vm1495, %v1493, %v1494
        %v1497 = vsel %vm1495, %v1494, %v1493
        %v1498 = vsel %vm1491, %v1497, 0.0
        %v1499 = vsel %vm1492, %v1496, 0.0
        %vm1500 = vcmp.ge.s32.totalorder %v262, 4294967294
        %vm1501 = vcmp.ge.s32.totalorder %v263, 4294967294
        %vm1502 = vcmp.le.s32.totalorder %v262, 13
        %vm1503 = vcmp.le.s32.totalorder %v263, 13
        %vm1504 = vmand %vm1500, %vm1502
        %vm1505 = vmand %vm1501, %vm1503
        %v1506 = vrot.slane %v971, 2
        %v1507 = vrot.slane %v972, 2
        %vm1508 = vcmp.lt.s32.totalorder %v262, 6
        %v1509 = vsel %vm1508, %v1506, %v1507
        %v1510 = vsel %vm1508, %v1507, %v1506
        %v1511 = vsel %vm1504, %v1509, 0.0
        %v1512 = vsel %vm1505, %v1510, 0.0
        %s1513 = scalar_lea.vmem [#allocation2], 768
        %v1514 = vld [vmem:[%s1513] sm:$0xf]
        %v1515 = vld [vmem:[%s1513 + $0x4] sm:$0xf]
        %v1516 = vld [vmem:[%s1513 + $0x8] sm:$0xf]
        %v1517 = vld [vmem:[%s1513 + $0xc] sm:$0xf]
        %v1518 = vld [vmem:[%s1513 + $0x10] sm:$0xf]
        %v1519 = vld [vmem:[%s1513 + $0x14] sm:$0xf]
        %v1520 = vld [vmem:[%s1513 + $0x18] sm:$0xf]
        %v1521 = vld [vmem:[%s1513 + $0x1c] sm:$0xf]
        %v1522 = vld [vmem:[%s1513 + $0x20] sm:$0xf]
        %v1523 = vld [vmem:[%s1513 + $0x24] sm:$0xf]
        %v1524 = vld [vmem:[%s1513 + $0x28] sm:$0xf]
        %v1525 = vld [vmem:[%s1513 + $0x2c] sm:$0xf]
        %v1526 = vld [vmem:[%s1513 + $0x30] sm:$0xf]
        %v1527 = vld [vmem:[%s1513 + $0x34] sm:$0xf]
        %v1528 = vld [vmem:[%s1513 + $0x38] sm:$0xf]
        %v1529 = vld [vmem:[%s1513 + $0x3c] sm:$0xf]
        %v1530 = vld [vmem:[%s1513 + $0x40] sm:$0xf]
        %v1531 = vld [vmem:[%s1513 + $0x44] sm:$0xf]
        %v1532 = vld [vmem:[%s1513 + $0x48] sm:$0xf]
        %v1533 = vld [vmem:[%s1513 + $0x4c] sm:$0xf]
        %v1534 = vld [vmem:[%s1513 + $0x50] sm:$0xf]
        %v1535 = vld [vmem:[%s1513 + $0x54] sm:$0xf]
        %v1536 = vld [vmem:[%s1513 + $0x58] sm:$0xf]
        %v1537 = vld [vmem:[%s1513 + $0x5c] sm:$0xf]
        %v1538 = vld [vmem:[%s1513 + $0x60] sm:$0xf]
        %v1539 = vld [vmem:[%s1513 + $0x64] sm:$0xf]
        %v1540 = vld [vmem:[%s1513 + $0x68] sm:$0xf]
        %v1541 = vld [vmem:[%s1513 + $0x6c] sm:$0xf]
        %v1542 = vld [vmem:[%s1513 + $0x70] sm:$0xf]
        %v1543 = vld [vmem:[%s1513 + $0x74] sm:$0xf]
        %v1544 = vld [vmem:[%s1513 + $0x78] sm:$0xf]
        %v1545 = vld [vmem:[%s1513 + $0x7c] sm:$0xf]
        %v1546 = vld [vmem:[%s1513 + $0x80] sm:$0xf]
        %v1547 = vld [vmem:[%s1513 + $0x84] sm:$0xf]
        %v1548 = vld [vmem:[%s1513 + $0x88] sm:$0xf]
        %v1549 = vld [vmem:[%s1513 + $0x8c] sm:$0xf]
        %v1550 = vld [vmem:[%s1513 + $0x90] sm:$0xf]
        %v1551 = vld [vmem:[%s1513 + $0x94] sm:$0xf]
        %v1552 = vld [vmem:[%s1513 + $0x98] sm:$0xf]
        %v1553 = vld [vmem:[%s1513 + $0x9c] sm:$0xf]
        %v1554 = vld [vmem:[%s1513 + $0xa0] sm:$0xf]
        %v1555 = vld [vmem:[%s1513 + $0xa4] sm:$0xf]
        %v1556 = vld [vmem:[%s1513 + $0xa8] sm:$0xf]
        %v1557 = vld [vmem:[%s1513 + $0xac] sm:$0xf]
        %v1558 = vld [vmem:[%s1513 + $0xb0] sm:$0xf]
        %v1559 = vld [vmem:[%s1513 + $0xb4] sm:$0xf]
        %v1560 = vld [vmem:[%s1513 + $0xb8] sm:$0xf]
        %v1561 = vld [vmem:[%s1513 + $0xbc] sm:$0xf]
        %v1562 = vpack.c.bf16 %v1499, %v1498
        %v1563 = vpack.c.bf16 %v1512, %v1511
        %s1564 = scalar_lea.vmem %s4, 6
        %v1565 = vld [vmem:[%s1564] sm:$0x1]
        %v1567 = vperm.slane %v1565, 0
        %v1617 = vunpack.c.l.b16 %v1514
        %v1618 = vunpack.c.l.b16 %v1515
        %v1619 = vunpack.c.l.b16 %v1516
        %v1620 = vunpack.c.l.b16 %v1517
        %v1621 = vunpack.c.l.b16 %v1518
        %v1622 = vunpack.c.l.b16 %v1519
        %v1623 = vunpack.c.l.b16 %v1520
        %v1624 = vunpack.c.l.b16 %v1521
        %v1625 = vunpack.c.l.b16 %v1522
        %v1626 = vunpack.c.l.b16 %v1523
        %v1627 = vunpack.c.l.b16 %v1524
        %v1628 = vunpack.c.l.b16 %v1525
        %v1629 = vunpack.c.l.b16 %v1526
        %v1630 = vunpack.c.l.b16 %v1527
        %v1631 = vunpack.c.l.b16 %v1528
        %v1632 = vunpack.c.l.b16 %v1529
        %v1633 = vunpack.c.l.b16 %v1530
        %v1634 = vunpack.c.l.b16 %v1531
        %v1635 = vunpack.c.l.b16 %v1532
        %v1636 = vunpack.c.l.b16 %v1533
        %v1637 = vunpack.c.l.b16 %v1534
        %v1638 = vunpack.c.l.b16 %v1535
        %v1639 = vunpack.c.l.b16 %v1536
        %v1640 = vunpack.c.l.b16 %v1537
        %v1641 = vunpack.c.l.b16 %v1538
        %v1642 = vunpack.c.l.b16 %v1539
        %v1643 = vunpack.c.l.b16 %v1540
        %v1644 = vunpack.c.l.b16 %v1541
        %v1645 = vunpack.c.l.b16 %v1542
        %v1646 = vunpack.c.l.b16 %v1543
        %v1647 = vunpack.c.l.b16 %v1544
        %v1648 = vunpack.c.l.b16 %v1545
        %v1649 = vunpack.c.l.b16 %v1546
        %v1650 = vunpack.c.l.b16 %v1547
        %v1651 = vunpack.c.l.b16 %v1548
        %v1652 = vunpack.c.l.b16 %v1549
        %v1653 = vunpack.c.l.b16 %v1550
        %v1654 = vunpack.c.l.b16 %v1551
        %v1655 = vunpack.c.l.b16 %v1552
        %v1656 = vunpack.c.l.b16 %v1553
        %v1657 = vunpack.c.l.b16 %v1554
        %v1658 = vunpack.c.l.b16 %v1555
        %v1659 = vunpack.c.l.b16 %v1556
        %v1660 = vunpack.c.l.b16 %v1557
        %v1661 = vunpack.c.l.b16 %v1558
        %v1662 = vunpack.c.l.b16 %v1559
        %v1663 = vunpack.c.l.b16 %v1560
        %v1664 = vunpack.c.l.b16 %v1561
        %v1665 = vpack.c.b16 %v1618, %v1617
        %v1666 = vpack.c.b16 %v1620, %v1619
        %v1667 = vpack.c.b16 %v1622, %v1621
        %v1668 = vpack.c.b16 %v1624, %v1623
        %v1669 = vpack.c.b16 %v1626, %v1625
        %v1670 = vpack.c.b16 %v1628, %v1627
        %v1671 = vpack.c.b16 %v1630, %v1629
        %v1672 = vpack.c.b16 %v1632, %v1631
        %v1673 = vpack.c.b16 %v1634, %v1633
        %v1674 = vpack.c.b16 %v1636, %v1635
        %v1675 = vpack.c.b16 %v1638, %v1637
        %v1676 = vpack.c.b16 %v1640, %v1639
        %v1677 = vpack.c.b16 %v1642, %v1641
        %v1678 = vpack.c.b16 %v1644, %v1643
        %v1679 = vpack.c.b16 %v1646, %v1645
        %v1680 = vpack.c.b16 %v1648, %v1647
        %v1681 = vpack.c.b16 %v1650, %v1649
        %v1682 = vpack.c.b16 %v1652, %v1651
        %v1683 = vpack.c.b16 %v1654, %v1653
        %v1684 = vpack.c.b16 %v1656, %v1655
        %v1685 = vpack.c.b16 %v1658, %v1657
        %v1686 = vpack.c.b16 %v1660, %v1659
        %v1687 = vpack.c.b16 %v1662, %v1661
        %v1688 = vpack.c.b16 %v1664, %v1663
        %1713 = vmatpush.bf16.msra.mxu0 %v1672
        %1714 = vmatpush.bf16.msra.mxu0 %v1671
        %1715 = vmatpush.bf16.msra.mxu0 %v1670
        %1716 = vmatpush.bf16.msra.mxu0 %v1669
        %1717 = vmatpush.bf16.msra.mxu0 %v1668
        %1718 = vmatpush.bf16.msra.mxu0 %v1667
        %1719 = vmatpush.bf16.msra.mxu0 %v1666
        %1720 = vmatpush.bf16.msra.mxu0 %v1665
        %1721 = vmatmul.bf16.gmra.mxu0 %v1562
        %v1722 = vpop.f32.mrf.mxu0
        %v1723 = vadd.f32 %v1567, %v1722
        %v1724 = vpop.f32.mrf.mxu0
        %v1725 = vadd.f32 %v1567, %v1724
        %1726 = vdwg.mxu0
        %1727 = vmatpush.bf16.msra.mxu0 %v1680
        %1728 = vmatpush.bf16.msra.mxu0 %v1679
        %1729 = vmatpush.bf16.msra.mxu0 %v1678
        %1730 = vmatpush.bf16.msra.mxu0 %v1677
        %1731 = vmatpush.bf16.msra.mxu0 %v1676
        %1732 = vmatpush.bf16.msra.mxu0 %v1675
        %1733 = vmatpush.bf16.msra.mxu0 %v1674
        %1734 = vmatpush.bf16.msra.mxu0 %v1673
        %1735 = vmatmul.bf16.gmra.mxu0 %v1035
        %v1736 = vpop.f32.mrf.mxu0
        %v1737 = vadd.f32 %v1723, %v1736
        %v1738 = vpop.f32.mrf.mxu0
        %v1739 = vadd.f32 %v1725, %v1738
        %1740 = vdwg.mxu0
        %1741 = vmatpush.bf16.msra.mxu0 %v1688
        %1742 = vmatpush.bf16.msra.mxu0 %v1687
        %1743 = vmatpush.bf16.msra.mxu0 %v1686
        %1744 = vmatpush.bf16.msra.mxu0 %v1685
        %1745 = vmatpush.bf16.msra.mxu0 %v1684
        %1746 = vmatpush.bf16.msra.mxu0 %v1683
        %1747 = vmatpush.bf16.msra.mxu0 %v1682
        %1748 = vmatpush.bf16.msra.mxu0 %v1681
        %1749 = vmatmul.bf16.gmra.mxu0 %v1563
        %v1750 = vpop.f32.mrf.mxu0
        %v1751 = vadd.f32 %v1737, %v1750
        %v1752 = vpop.f32.mrf.mxu0
        %v1753 = vadd.f32 %v1739, %v1752
        %1754 = vdwg.mxu0
        %v1755 = vadd.f32 %v355, %v1751
        %v1756 = vadd.f32 %v357, %v1753
        %1757 = vrot.lane.b32.xlu0 %v1485, 8
        %v1758 = vpop.permute.xlu0 %1757
        %1759 = vrot.lane.b32.xlu0 %v1486, 8
        %v1760 = vpop.permute.xlu0 %1759
        %v1761 = vsel %vm270, %v1758, %v1485
        %v1762 = vsel %vm270, %v1760, %v1486
        %1763 = vrot.lane.b32.xlu0 %v1485, 120
        %v1764 = vpop.permute.xlu0 %1763
        %1765 = vrot.lane.b32.xlu0 %v1486, 120
        %v1766 = vpop.permute.xlu0 %1765
        %v1767 = vsel %vm271, %v1764, %v1485
        %v1768 = vsel %vm271, %v1766, %v1486
        %v1769 = vmax.f32 %v1761, %v1767
        %v1770 = vmax.f32 %v1762, %v1768
        %v1771 = vmax.f32 %v1485, %v1769
        %v1772 = vmax.f32 %v1486, %v1770
        %v1773 = vrot.slane %v1771, 7
        %v1774 = vrot.slane %v1772, 7
        %v1775 = vsel %vm456, %v1773, %v1774
        %v1776 = vsel %vm456, %v1774, %v1773
        %v1777 = vsel %vm266, %v1776, %v1771
        %v1778 = vsel %vm267, %v1775, %v1772
        %v1779 = vrot.slane %v1771, 1
        %v1780 = vrot.slane %v1772, 1
        %v1781 = vsel %vm467, %v1779, %v1780
        %v1782 = vsel %vm467, %v1780, %v1779
        %v1783 = vsel %vm268, %v1781, %v1771
        %v1784 = vsel %vm269, %v1782, %v1772
        %v1785 = vmax.f32 %v1777, %v1783
        %v1786 = vmax.f32 %v1778, %v1784
        %v1787 = vmax.f32 %v1771, %v1785
        %v1788 = vmax.f32 %v1772, %v1786
        %v1789 = vadd.f32 %v1787, %v355
        %v1790 = vadd.f32 %v1788, %v357
        %v1791 = vmax.f32 %v1755, 0.0
        %v1792 = vmax.f32 %v1756, 0.0
        %v1793 = vrot.slane %v1791, 7
        %v1794 = vrot.slane %v1792, 7
        %v1795 = vsel %vm456, %v1793, %v1794
        %v1796 = vsel %vm456, %v1794, %v1793
        %v1797 = vsel %vm452, %v1796, 0.0
        %v1798 = vsel %vm453, %v1795, 0.0
        %v1799 = vrot.slane %v1791, 1
        %v1800 = vrot.slane %v1792, 1
        %v1801 = vsel %vm467, %v1799, %v1800
        %v1802 = vsel %vm467, %v1800, %v1799
        %v1803 = vsel %vm463, %v1801, 0.0
        %v1804 = vsel %vm464, %v1802, 0.0
        %s1805 = scalar_lea.vmem [#allocation2], 960
        %v1806 = vld [vmem:[%s1805] sm:$0xf]
        %v1807 = vld [vmem:[%s1805 + $0x4] sm:$0xf]
        %v1808 = vld [vmem:[%s1805 + $0x8] sm:$0xf]
        %v1809 = vld [vmem:[%s1805 + $0xc] sm:$0xf]
        %v1810 = vld [vmem:[%s1805 + $0x10] sm:$0xf]
        %v1811 = vld [vmem:[%s1805 + $0x14] sm:$0xf]
        %v1812 = vld [vmem:[%s1805 + $0x18] sm:$0xf]
        %v1813 = vld [vmem:[%s1805 + $0x1c] sm:$0xf]
        %v1814 = vld [vmem:[%s1805 + $0x20] sm:$0xf]
        %v1815 = vld [vmem:[%s1805 + $0x24] sm:$0xf]
        %v1816 = vld [vmem:[%s1805 + $0x28] sm:$0xf]
        %v1817 = vld [vmem:[%s1805 + $0x2c] sm:$0xf]
        %v1818 = vld [vmem:[%s1805 + $0x30] sm:$0xf]
        %v1819 = vld [vmem:[%s1805 + $0x34] sm:$0xf]
        %v1820 = vld [vmem:[%s1805 + $0x38] sm:$0xf]
        %v1821 = vld [vmem:[%s1805 + $0x3c] sm:$0xf]
        %v1822 = vld [vmem:[%s1805 + $0x40] sm:$0xf]
        %v1823 = vld [vmem:[%s1805 + $0x44] sm:$0xf]
        %v1824 = vld [vmem:[%s1805 + $0x48] sm:$0xf]
        %v1825 = vld [vmem:[%s1805 + $0x4c] sm:$0xf]
        %v1826 = vld [vmem:[%s1805 + $0x50] sm:$0xf]
        %v1827 = vld [vmem:[%s1805 + $0x54] sm:$0xf]
        %v1828 = vld [vmem:[%s1805 + $0x58] sm:$0xf]
        %v1829 = vld [vmem:[%s1805 + $0x5c] sm:$0xf]
        %v1830 = vld [vmem:[%s1805 + $0x60] sm:$0xf]
        %v1831 = vld [vmem:[%s1805 + $0x64] sm:$0xf]
        %v1832 = vld [vmem:[%s1805 + $0x68] sm:$0xf]
        %v1833 = vld [vmem:[%s1805 + $0x6c] sm:$0xf]
        %v1834 = vld [vmem:[%s1805 + $0x70] sm:$0xf]
        %v1835 = vld [vmem:[%s1805 + $0x74] sm:$0xf]
        %v1836 = vld [vmem:[%s1805 + $0x78] sm:$0xf]
        %v1837 = vld [vmem:[%s1805 + $0x7c] sm:$0xf]
        %v1838 = vld [vmem:[%s1805 + $0x80] sm:$0xf]
        %v1839 = vld [vmem:[%s1805 + $0x84] sm:$0xf]
        %v1840 = vld [vmem:[%s1805 + $0x88] sm:$0xf]
        %v1841 = vld [vmem:[%s1805 + $0x8c] sm:$0xf]
        %v1842 = vld [vmem:[%s1805 + $0x90] sm:$0xf]
        %v1843 = vld [vmem:[%s1805 + $0x94] sm:$0xf]
        %v1844 = vld [vmem:[%s1805 + $0x98] sm:$0xf]
        %v1845 = vld [vmem:[%s1805 + $0x9c] sm:$0xf]
        %v1846 = vld [vmem:[%s1805 + $0xa0] sm:$0xf]
        %v1847 = vld [vmem:[%s1805 + $0xa4] sm:$0xf]
        %v1848 = vld [vmem:[%s1805 + $0xa8] sm:$0xf]
        %v1849 = vld [vmem:[%s1805 + $0xac] sm:$0xf]
        %v1850 = vld [vmem:[%s1805 + $0xb0] sm:$0xf]
        %v1851 = vld [vmem:[%s1805 + $0xb4] sm:$0xf]
        %v1852 = vld [vmem:[%s1805 + $0xb8] sm:$0xf]
        %v1853 = vld [vmem:[%s1805 + $0xbc] sm:$0xf]
        %v1854 = vpack.c.bf16 %v1798, %v1797
        %v1855 = vpack.c.bf16 %v1792, %v1791
        %v1856 = vpack.c.bf16 %v1804, %v1803
        %s1857 = scalar_lea.vmem %s4, 7
        %v1858 = vld [vmem:[%s1857] sm:$0x1]
        %v1860 = vperm.slane %v1858, 0
        %v1910 = vunpack.c.l.b16 %v1806
        %v1911 = vunpack.c.l.b16 %v1807
        %v1912 = vunpack.c.l.b16 %v1808
        %v1913 = vunpack.c.l.b16 %v1809
        %v1914 = vunpack.c.l.b16 %v1810
        %v1915 = vunpack.c.l.b16 %v1811
        %v1916 = vunpack.c.l.b16 %v1812
        %v1917 = vunpack.c.l.b16 %v1813
        %v1918 = vunpack.c.l.b16 %v1814
        %v1919 = vunpack.c.l.b16 %v1815
        %v1920 = vunpack.c.l.b16 %v1816
        %v1921 = vunpack.c.l.b16 %v1817
        %v1922 = vunpack.c.l.b16 %v1818
        %v1923 = vunpack.c.l.b16 %v1819
        %v1924 = vunpack.c.l.b16 %v1820
        %v1925 = vunpack.c.l.b16 %v1821
        %v1926 = vunpack.c.l.b16 %v1822
        %v1927 = vunpack.c.l.b16 %v1823
        %v1928 = vunpack.c.l.b16 %v1824
        %v1929 = vunpack.c.l.b16 %v1825
        %v1930 = vunpack.c.l.b16 %v1826
        %v1931 = vunpack.c.l.b16 %v1827
        %v1932 = vunpack.c.l.b16 %v1828
        %v1933 = vunpack.c.l.b16 %v1829
        %v1934 = vunpack.c.l.b16 %v1830
        %v1935 = vunpack.c.l.b16 %v1831
        %v1936 = vunpack.c.l.b16 %v1832
        %v1937 = vunpack.c.l.b16 %v1833
        %v1938 = vunpack.c.l.b16 %v1834
        %v1939 = vunpack.c.l.b16 %v1835
        %v1940 = vunpack.c.l.b16 %v1836
        %v1941 = vunpack.c.l.b16 %v1837
        %v1942 = vunpack.c.l.b16 %v1838
        %v1943 = vunpack.c.l.b16 %v1839
        %v1944 = vunpack.c.l.b16 %v1840
        %v1945 = vunpack.c.l.b16 %v1841
        %v1946 = vunpack.c.l.b16 %v1842
        %v1947 = vunpack.c.l.b16 %v1843
        %v1948 = vunpack.c.l.b16 %v1844
        %v1949 = vunpack.c.l.b16 %v1845
        %v1950 = vunpack.c.l.b16 %v1846
        %v1951 = vunpack.c.l.b16 %v1847
        %v1952 = vunpack.c.l.b16 %v1848
        %v1953 = vunpack.c.l.b16 %v1849
        %v1954 = vunpack.c.l.b16 %v1850
        %v1955 = vunpack.c.l.b16 %v1851
        %v1956 = vunpack.c.l.b16 %v1852
        %v1957 = vunpack.c.l.b16 %v1853
        %v1958 = vpack.c.b16 %v1911, %v1910
        %v1959 = vpack.c.b16 %v1913, %v1912
        %v1960 = vpack.c.b16 %v1915, %v1914
        %v1961 = vpack.c.b16 %v1917, %v1916
        %v1962 = vpack.c.b16 %v1919, %v1918
        %v1963 = vpack.c.b16 %v1921, %v1920
        %v1964 = vpack.c.b16 %v1923, %v1922
        %v1965 = vpack.c.b16 %v1925, %v1924
        %v1966 = vpack.c.b16 %v1927, %v1926
        %v1967 = vpack.c.b16 %v1929, %v1928
        %v1968 = vpack.c.b16 %v1931, %v1930
        %v1969 = vpack.c.b16 %v1933, %v1932
        %v1970 = vpack.c.b16 %v1935, %v1934
        %v1971 = vpack.c.b16 %v1937, %v1936
        %v1972 = vpack.c.b16 %v1939, %v1938
        %v1973 = vpack.c.b16 %v1941, %v1940
        %v1974 = vpack.c.b16 %v1943, %v1942
        %v1975 = vpack.c.b16 %v1945, %v1944
        %v1976 = vpack.c.b16 %v1947, %v1946
        %v1977 = vpack.c.b16 %v1949, %v1948
        %v1978 = vpack.c.b16 %v1951, %v1950
        %v1979 = vpack.c.b16 %v1953, %v1952
        %v1980 = vpack.c.b16 %v1955, %v1954
        %v1981 = vpack.c.b16 %v1957, %v1956
        %2006 = vmatpush.bf16.msra.mxu0 %v1965
        %2007 = vmatpush.bf16.msra.mxu0 %v1964
        %2008 = vmatpush.bf16.msra.mxu0 %v1963
        %2009 = vmatpush.bf16.msra.mxu0 %v1962
        %2010 = vmatpush.bf16.msra.mxu0 %v1961
        %2011 = vmatpush.bf16.msra.mxu0 %v1960
        %2012 = vmatpush.bf16.msra.mxu0 %v1959
        %2013 = vmatpush.bf16.msra.mxu0 %v1958
        %2014 = vmatmul.bf16.gmra.mxu0 %v1854
        %v2015 = vpop.f32.mrf.mxu0
        %v2016 = vadd.f32 %v1860, %v2015
        %v2017 = vpop.f32.mrf.mxu0
        %v2018 = vadd.f32 %v1860, %v2017
        %2019 = vdwg.mxu0
        %2020 = vmatpush.bf16.msra.mxu0 %v1973
        %2021 = vmatpush.bf16.msra.mxu0 %v1972
        %2022 = vmatpush.bf16.msra.mxu0 %v1971
        %2023 = vmatpush.bf16.msra.mxu0 %v1970
        %2024 = vmatpush.bf16.msra.mxu0 %v1969
        %2025 = vmatpush.bf16.msra.mxu0 %v1968
        %2026 = vmatpush.bf16.msra.mxu0 %v1967
        %2027 = vmatpush.bf16.msra.mxu0 %v1966
        %2028 = vmatmul.bf16.gmra.mxu0 %v1855
        %v2029 = vpop.f32.mrf.mxu0
        %v2030 = vadd.f32 %v2016, %v2029
        %v2031 = vpop.f32.mrf.mxu0
        %v2032 = vadd.f32 %v2018, %v2031
        %2033 = vdwg.mxu0
        %2034 = vmatpush.bf16.msra.mxu0 %v1981
        %2035 = vmatpush.bf16.msra.mxu0 %v1980
        %2036 = vmatpush.bf16.msra.mxu0 %v1979
        %2037 = vmatpush.bf16.msra.mxu0 %v1978
        %2038 = vmatpush.bf16.msra.mxu0 %v1977
        %2039 = vmatpush.bf16.msra.mxu0 %v1976
        %2040 = vmatpush.bf16.msra.mxu0 %v1975
        %2041 = vmatpush.bf16.msra.mxu0 %v1974
        %2042 = vmatmul.bf16.gmra.mxu0 %v1856
        %v2043 = vpop.f32.mrf.mxu0
        %v2044 = vadd.f32 %v2030, %v2043
        %v2045 = vpop.f32.mrf.mxu0
        %v2046 = vadd.f32 %v2032, %v2045
        %2047 = vdwg.mxu0
        %v2048 = vmax.f32 %v2044, 0.0
        %v2049 = vmax.f32 %v2046, 0.0
        %v2050 = vrot.slane %v2048, 7
        %v2051 = vrot.slane %v2049, 7
        %v2052 = vsel %vm456, %v2050, %v2051
        %v2053 = vsel %vm456, %v2051, %v2050
        %v2054 = vsel %vm452, %v2053, 0.0
        %v2055 = vsel %vm453, %v2052, 0.0
        %v2056 = vrot.slane %v2048, 1
        %v2057 = vrot.slane %v2049, 1
        %v2058 = vsel %vm467, %v2056, %v2057
        %v2059 = vsel %vm467, %v2057, %v2056
        %v2060 = vsel %vm463, %v2058, 0.0
        %v2061 = vsel %vm464, %v2059, 0.0
        %s2062 = scalar_lea.vmem [#allocation2], 1152
        %v2063 = vld [vmem:[%s2062] sm:$0xf]
        %v2064 = vld [vmem:[%s2062 + $0x4] sm:$0xf]
        %v2065 = vld [vmem:[%s2062 + $0x8] sm:$0xf]
        %v2066 = vld [vmem:[%s2062 + $0xc] sm:$0xf]
        %v2067 = vld [vmem:[%s2062 + $0x10] sm:$0xf]
        %v2068 = vld [vmem:[%s2062 + $0x14] sm:$0xf]
        %v2069 = vld [vmem:[%s2062 + $0x18] sm:$0xf]
        %v2070 = vld [vmem:[%s2062 + $0x1c] sm:$0xf]
        %v2071 = vld [vmem:[%s2062 + $0x20] sm:$0xf]
        %v2072 = vld [vmem:[%s2062 + $0x24] sm:$0xf]
        %v2073 = vld [vmem:[%s2062 + $0x28] sm:$0xf]
        %v2074 = vld [vmem:[%s2062 + $0x2c] sm:$0xf]
        %v2075 = vld [vmem:[%s2062 + $0x30] sm:$0xf]
        %v2076 = vld [vmem:[%s2062 + $0x34] sm:$0xf]
        %v2077 = vld [vmem:[%s2062 + $0x38] sm:$0xf]
        %v2078 = vld [vmem:[%s2062 + $0x3c] sm:$0xf]
        %v2079 = vld [vmem:[%s2062 + $0x40] sm:$0xf]
        %v2080 = vld [vmem:[%s2062 + $0x44] sm:$0xf]
        %v2081 = vld [vmem:[%s2062 + $0x48] sm:$0xf]
        %v2082 = vld [vmem:[%s2062 + $0x4c] sm:$0xf]
        %v2083 = vld [vmem:[%s2062 + $0x50] sm:$0xf]
        %v2084 = vld [vmem:[%s2062 + $0x54] sm:$0xf]
        %v2085 = vld [vmem:[%s2062 + $0x58] sm:$0xf]
        %v2086 = vld [vmem:[%s2062 + $0x5c] sm:$0xf]
        %v2087 = vld [vmem:[%s2062 + $0x60] sm:$0xf]
        %v2088 = vld [vmem:[%s2062 + $0x64] sm:$0xf]
        %v2089 = vld [vmem:[%s2062 + $0x68] sm:$0xf]
        %v2090 = vld [vmem:[%s2062 + $0x6c] sm:$0xf]
        %v2091 = vld [vmem:[%s2062 + $0x70] sm:$0xf]
        %v2092 = vld [vmem:[%s2062 + $0x74] sm:$0xf]
        %v2093 = vld [vmem:[%s2062 + $0x78] sm:$0xf]
        %v2094 = vld [vmem:[%s2062 + $0x7c] sm:$0xf]
        %v2095 = vld [vmem:[%s2062 + $0x80] sm:$0xf]
        %v2096 = vld [vmem:[%s2062 + $0x84] sm:$0xf]
        %v2097 = vld [vmem:[%s2062 + $0x88] sm:$0xf]
        %v2098 = vld [vmem:[%s2062 + $0x8c] sm:$0xf]
        %v2099 = vld [vmem:[%s2062 + $0x90] sm:$0xf]
        %v2100 = vld [vmem:[%s2062 + $0x94] sm:$0xf]
        %v2101 = vld [vmem:[%s2062 + $0x98] sm:$0xf]
        %v2102 = vld [vmem:[%s2062 + $0x9c] sm:$0xf]
        %v2103 = vld [vmem:[%s2062 + $0xa0] sm:$0xf]
        %v2104 = vld [vmem:[%s2062 + $0xa4] sm:$0xf]
        %v2105 = vld [vmem:[%s2062 + $0xa8] sm:$0xf]
        %v2106 = vld [vmem:[%s2062 + $0xac] sm:$0xf]
        %v2107 = vld [vmem:[%s2062 + $0xb0] sm:$0xf]
        %v2108 = vld [vmem:[%s2062 + $0xb4] sm:$0xf]
        %v2109 = vld [vmem:[%s2062 + $0xb8] sm:$0xf]
        %v2110 = vld [vmem:[%s2062 + $0xbc] sm:$0xf]
        %v2111 = vpack.c.bf16 %v2055, %v2054
        %v2112 = vpack.c.bf16 %v2049, %v2048
        %v2113 = vpack.c.bf16 %v2061, %v2060
        %s2114 = scalar_lea.vmem %s4, 8
        %v2115 = vld [vmem:[%s2114] sm:$0x1]
        %v2117 = vperm.slane %v2115, 0
        %v2167 = vunpack.c.l.b16 %v2063
        %v2168 = vunpack.c.l.b16 %v2064
        %v2169 = vunpack.c.l.b16 %v2065
        %v2170 = vunpack.c.l.b16 %v2066
        %v2171 = vunpack.c.l.b16 %v2067
        %v2172 = vunpack.c.l.b16 %v2068
        %v2173 = vunpack.c.l.b16 %v2069
        %v2174 = vunpack.c.l.b16 %v2070
        %v2175 = vunpack.c.l.b16 %v2071
        %v2176 = vunpack.c.l.b16 %v2072
        %v2177 = vunpack.c.l.b16 %v2073
        %v2178 = vunpack.c.l.b16 %v2074
        %v2179 = vunpack.c.l.b16 %v2075
        %v2180 = vunpack.c.l.b16 %v2076
        %v2181 = vunpack.c.l.b16 %v2077
        %v2182 = vunpack.c.l.b16 %v2078
        %v2183 = vunpack.c.l.b16 %v2079
        %v2184 = vunpack.c.l.b16 %v2080
        %v2185 = vunpack.c.l.b16 %v2081
        %v2186 = vunpack.c.l.b16 %v2082
        %v2187 = vunpack.c.l.b16 %v2083
        %v2188 = vunpack.c.l.b16 %v2084
        %v2189 = vunpack.c.l.b16 %v2085
        %v2190 = vunpack.c.l.b16 %v2086
        %v2191 = vunpack.c.l.b16 %v2087
        %v2192 = vunpack.c.l.b16 %v2088
        %v2193 = vunpack.c.l.b16 %v2089
        %v2194 = vunpack.c.l.b16 %v2090
        %v2195 = vunpack.c.l.b16 %v2091
        %v2196 = vunpack.c.l.b16 %v2092
        %v2197 = vunpack.c.l.b16 %v2093
        %v2198 = vunpack.c.l.b16 %v2094
        %v2199 = vunpack.c.l.b16 %v2095
        %v2200 = vunpack.c.l.b16 %v2096
        %v2201 = vunpack.c.l.b16 %v2097
        %v2202 = vunpack.c.l.b16 %v2098
        %v2203 = vunpack.c.l.b16 %v2099
        %v2204 = vunpack.c.l.b16 %v2100
        %v2205 = vunpack.c.l.b16 %v2101
        %v2206 = vunpack.c.l.b16 %v2102
        %v2207 = vunpack.c.l.b16 %v2103
        %v2208 = vunpack.c.l.b16 %v2104
        %v2209 = vunpack.c.l.b16 %v2105
        %v2210 = vunpack.c.l.b16 %v2106
        %v2211 = vunpack.c.l.b16 %v2107
        %v2212 = vunpack.c.l.b16 %v2108
        %v2213 = vunpack.c.l.b16 %v2109
        %v2214 = vunpack.c.l.b16 %v2110
        %v2215 = vpack.c.b16 %v2168, %v2167
        %v2216 = vpack.c.b16 %v2170, %v2169
        %v2217 = vpack.c.b16 %v2172, %v2171
        %v2218 = vpack.c.b16 %v2174, %v2173
        %v2219 = vpack.c.b16 %v2176, %v2175
        %v2220 = vpack.c.b16 %v2178, %v2177
        %v2221 = vpack.c.b16 %v2180, %v2179
        %v2222 = vpack.c.b16 %v2182, %v2181
        %v2223 = vpack.c.b16 %v2184, %v2183
        %v2224 = vpack.c.b16 %v2186, %v2185
        %v2225 = vpack.c.b16 %v2188, %v2187
        %v2226 = vpack.c.b16 %v2190, %v2189
        %v2227 = vpack.c.b16 %v2192, %v2191
        %v2228 = vpack.c.b16 %v2194, %v2193
        %v2229 = vpack.c.b16 %v2196, %v2195
        %v2230 = vpack.c.b16 %v2198, %v2197
        %v2231 = vpack.c.b16 %v2200, %v2199
        %v2232 = vpack.c.b16 %v2202, %v2201
        %v2233 = vpack.c.b16 %v2204, %v2203
        %v2234 = vpack.c.b16 %v2206, %v2205
        %v2235 = vpack.c.b16 %v2208, %v2207
        %v2236 = vpack.c.b16 %v2210, %v2209
        %v2237 = vpack.c.b16 %v2212, %v2211
        %v2238 = vpack.c.b16 %v2214, %v2213
        %2263 = vmatpush.bf16.msra.mxu0 %v2222
        %2264 = vmatpush.bf16.msra.mxu0 %v2221
        %2265 = vmatpush.bf16.msra.mxu0 %v2220
        %2266 = vmatpush.bf16.msra.mxu0 %v2219
        %2267 = vmatpush.bf16.msra.mxu0 %v2218
        %2268 = vmatpush.bf16.msra.mxu0 %v2217
        %2269 = vmatpush.bf16.msra.mxu0 %v2216
        %2270 = vmatpush.bf16.msra.mxu0 %v2215
        %2271 = vmatmul.bf16.gmra.mxu0 %v2111
        %v2272 = vpop.f32.mrf.mxu0
        %v2273 = vadd.f32 %v2117, %v2272
        %v2274 = vpop.f32.mrf.mxu0
        %v2275 = vadd.f32 %v2117, %v2274
        %2276 = vdwg.mxu0
        %2277 = vmatpush.bf16.msra.mxu0 %v2230
        %2278 = vmatpush.bf16.msra.mxu0 %v2229
        %2279 = vmatpush.bf16.msra.mxu0 %v2228
        %2280 = vmatpush.bf16.msra.mxu0 %v2227
        %2281 = vmatpush.bf16.msra.mxu0 %v2226
        %2282 = vmatpush.bf16.msra.mxu0 %v2225
        %2283 = vmatpush.bf16.msra.mxu0 %v2224
        %2284 = vmatpush.bf16.msra.mxu0 %v2223
        %2285 = vmatmul.bf16.gmra.mxu0 %v2112
        %v2286 = vpop.f32.mrf.mxu0
        %v2287 = vadd.f32 %v2273, %v2286
        %v2288 = vpop.f32.mrf.mxu0
        %v2289 = vadd.f32 %v2275, %v2288
        %2290 = vdwg.mxu0
        %2291 = vmatpush.bf16.msra.mxu0 %v2238
        %2292 = vmatpush.bf16.msra.mxu0 %v2237
        %2293 = vmatpush.bf16.msra.mxu0 %v2236
        %2294 = vmatpush.bf16.msra.mxu0 %v2235
        %2295 = vmatpush.bf16.msra.mxu0 %v2234
        %2296 = vmatpush.bf16.msra.mxu0 %v2233
        %2297 = vmatpush.bf16.msra.mxu0 %v2232
        %2298 = vmatpush.bf16.msra.mxu0 %v2231
        %2299 = vmatmul.bf16.gmra.mxu0 %v2113
        %v2300 = vpop.f32.mrf.mxu0
        %v2301 = vadd.f32 %v2287, %v2300
        %v2302 = vpop.f32.mrf.mxu0
        %v2303 = vadd.f32 %v2289, %v2302
        %2304 = vdwg.mxu0
        %2305 = vrot.lane.b32.xlu0 %v444, 8
        %v2306 = vpop.permute.xlu0 %2305
        %2307 = vrot.lane.b32.xlu0 %v446, 8
        %v2308 = vpop.permute.xlu0 %2307
        %v2309 = vsel %vm270, %v2306, %v444
        %v2310 = vsel %vm270, %v2308, %v446
        %2311 = vrot.lane.b32.xlu0 %v444, 120
        %v2312 = vpop.permute.xlu0 %2311
        %2313 = vrot.lane.b32.xlu0 %v446, 120
        %v2314 = vpop.permute.xlu0 %2313
        %v2315 = vsel %vm271, %v2312, %v444
        %v2316 = vsel %vm271, %v2314, %v446
        %v2317 = vmax.f32 %v2309, %v2315
        %v2318 = vmax.f32 %v2310, %v2316
        %v2319 = vmax.f32 %v444, %v2317
        %v2320 = vmax.f32 %v446, %v2318
        %v2321 = vrot.slane %v2319, 7
        %v2322 = vrot.slane %v2320, 7
        %v2323 = vsel %vm456, %v2321, %v2322
        %v2324 = vsel %vm456, %v2322, %v2321
        %v2325 = vsel %vm266, %v2324, %v2319
        %v2326 = vsel %vm267, %v2323, %v2320
        %v2327 = vrot.slane %v2319, 1
        %v2328 = vrot.slane %v2320, 1
        %v2329 = vsel %vm467, %v2327, %v2328
        %v2330 = vsel %vm467, %v2328, %v2327
        %v2331 = vsel %vm268, %v2329, %v2319
        %v2332 = vsel %vm269, %v2330, %v2320
        %v2333 = vmax.f32 %v2325, %v2331
        %v2334 = vmax.f32 %v2326, %v2332
        %v2335 = vmax.f32 %v2319, %v2333
        %v2336 = vmax.f32 %v2320, %v2334
        %v2337 = vadd.f32 %v2301, %v2335
        %v2338 = vadd.f32 %v2303, %v2336
        %2339 = vst [vmem:[%s247] sm:$0xff] %v1485
        %2340 = vst [vmem:[%s247 + $0x8] sm:$0xff] %v1486
        %s2341 = scalar_lea.vmem %s247, 16 [#allocation4]
        %2342 = vst [vmem:[%s2341] sm:$0xff] %v1755
        %2343 = vst [vmem:[%s2341 + $0x8] sm:$0xff] %v1756
        %s2344 = scalar_lea.vmem %s247, 32 [#allocation4]
        %2345 = vst [vmem:[%s2344] sm:$0xff] %v1789
        %2346 = vst [vmem:[%s2344 + $0x8] sm:$0xff] %v1790
        %s2347 = scalar_lea.vmem %s247, 48 [#allocation4]
        %2348 = vst [vmem:[%s2347] sm:$0xff] %v2337
        %2349 = vst [vmem:[%s2347 + $0x8] sm:$0xff] %v2338
        %s2350 = sand.u32 %s140, 1
        %s2351 = sand.u32 %s140, 1
        %s2352 = smul.addr %s2351, 64
        %s2353 = scalar_lea.vmem [#allocation4], %s2352
        // Predicated region
        $region45: #{cell_forward.1} parent=39 // pred_check
          %p2354 = pneg %p150
        $region46: #{cell_forward.1} parent=39 // pred_check_branch
          %2356 = sbr.rel (%p2354) target = $region48
        $region47: #{cell_forward.1} parent=39 // pred_region
          %s2357 = smul.u32 2, %s17
          %s2358 = smul.addr %s2357, 8
          %s2359 = scalar_lea.vmem %s5, %s2358
          // Predicated region
          $region49: #{cell_forward.1} parent=47 // pred_check
            _
          $region50: #{cell_forward.1} parent=47 // pred_check_branch
            %2361 = sbr.rel (0) target = $region52
          $region51: #{cell_forward.1} parent=47 // pred_region
            // Predicated region
            $region53: #{cell_forward.1} parent=51 // pred_check
              _
            $region54: #{cell_forward.1} parent=51 // pred_check_branch
              %2363 = sbr.rel (0) target = $region56
            $region55: #{cell_forward.1} parent=51 // pred_region
              // Predicated region
              $region68: #{cell_forward.1} parent=55 // pred_check
                _
              $region69: #{cell_forward.1} parent=55 // pred_check_branch
                %2393 = sbr.rel (0) target = $region71
              $region70: #{cell_forward.1} parent=55 // pred_region
                loop: start=0, step=1, limit=1
                $region72: #{cell_forward.1} parent=70 // loop_pre_header
                  _
                $region73: #{cell_forward.1} parent=70 // loop_header
                  %s2395 = sphi 0, %s2399
                  %p2396 = scmp.ge.s32.totalorder %s2395, 1
                  %s2400 = sphi %s2353, %s2353
                  %s2401 = sphi %s2359, %s2359
                $region74: #{cell_forward.1} parent=70 // loop_header_branch
                  %2398 = sbr.rel (%p2396) target = $region78
                $region75: #{cell_forward.1} parent=70 // loop_body
                  %v2402 = vld [vmem:[%s2400] sm:$0xff]
                  %2403 = vst [vmem:[%s2401] sm:$0xff] %v2402
                  %v2404 = vld [vmem:[%s2400 + $0x8] sm:$0xff]
                  %2405 = vst [vmem:[%s2401 + $0x8] sm:$0xff] %v2404
                  %v2406 = vld [vmem:[%s2400 + $0x10] sm:$0xff]
                  %2407 = vst [vmem:[%s2401 + $0x20] sm:$0xff] %v2406
                  %v2408 = vld [vmem:[%s2400 + $0x18] sm:$0xff]
                  %2409 = vst [vmem:[%s2401 + $0x28] sm:$0xff] %v2408
                  %v2410 = vld [vmem:[%s2400 + $0x20] sm:$0xff]
                  %2411 = vst [vmem:[%s2401 + $0x40] sm:$0xff] %v2410
                  %v2412 = vld [vmem:[%s2400 + $0x28] sm:$0xff]
                  %2413 = vst [vmem:[%s2401 + $0x48] sm:$0xff] %v2412
                  %v2414 = vld [vmem:[%s2400 + $0x30] sm:$0xff]
                  %2415 = vst [vmem:[%s2401 + $0x60] sm:$0xff] %v2414
                  %v2416 = vld [vmem:[%s2400 + $0x38] sm:$0xff]
                  %2417 = vst [vmem:[%s2401 + $0x68] sm:$0xff] %v2416
                $region76: #{cell_forward.1} parent=70 // loop_footer
                  %s2399 = sadd.s32 1, %s2395
                $region77: #{cell_forward.1} parent=70 // loop_footer_branch
                  %2394 = sbr.rel target = $region73
                $region78: #{cell_forward.1} parent=70 // loop_exit
                  _
              $region71: #{cell_forward.1} parent=55 // pred_fallthru
                _
              // Predicated region
              $region79: #{cell_forward.1} parent=55 // pred_check
                _
              $region80: #{cell_forward.1} parent=55 // pred_check_branch
                %2419 = sbr.rel target = $region82
              $region81: #{cell_forward.1} parent=55 // pred_region
                _
              $region82: #{cell_forward.1} parent=55 // pred_fallthru
                _
            $region56: #{cell_forward.1} parent=51 // pred_fallthru
              _
            // Predicated region
            $region57: #{cell_forward.1} parent=51 // pred_check
              _
            $region58: #{cell_forward.1} parent=51 // pred_check_branch
              %2365 = sbr.rel target = $region60
            $region59: #{cell_forward.1} parent=51 // pred_region
              %s2367 = ssub.s32 256, 1
              loop: start=0, step=1, limit=1
              $region61: #{cell_forward.1} parent=59 // loop_pre_header
                _
              $region62: #{cell_forward.1} parent=59 // loop_header
                %s2369 = sphi 0, %s2373
                %p2370 = scmp.ge.s32.totalorder %s2369, 1
                %s2374 = sphi %s2353, %s2353
                %s2375 = sphi %s2359, %s2359
              $region63: #{cell_forward.1} parent=59 // loop_header_branch
                %2372 = sbr.rel (%p2370) target = $region67
              $region64: #{cell_forward.1} parent=59 // loop_body
                %v2376 = vld [vmem:[%s2374] sm:%s2367]
                %2377 = vst [vmem:[%s2375] sm:%s2367] %v2376
                %v2378 = vld [vmem:[%s2374 + $0x8] sm:%s2367]
                %2379 = vst [vmem:[%s2375 + $0x8] sm:%s2367] %v2378
                %v2380 = vld [vmem:[%s2374 + $0x10] sm:%s2367]
                %2381 = vst [vmem:[%s2375 + $0x20] sm:%s2367] %v2380
                %v2382 = vld [vmem:[%s2374 + $0x18] sm:%s2367]
                %2383 = vst [vmem:[%s2375 + $0x28] sm:%s2367] %v2382
                %v2384 = vld [vmem:[%s2374 + $0x20] sm:%s2367]
                %2385 = vst [vmem:[%s2375 + $0x40] sm:%s2367] %v2384
                %v2386 = vld [vmem:[%s2374 + $0x28] sm:%s2367]
                %2387 = vst [vmem:[%s2375 + $0x48] sm:%s2367] %v2386
                %v2388 = vld [vmem:[%s2374 + $0x30] sm:%s2367]
                %2389 = vst [vmem:[%s2375 + $0x60] sm:%s2367] %v2388
                %v2390 = vld [vmem:[%s2374 + $0x38] sm:%s2367]
                %2391 = vst [vmem:[%s2375 + $0x68] sm:%s2367] %v2390
              $region65: #{cell_forward.1} parent=59 // loop_footer
                %s2373 = sadd.s32 1, %s2369
              $region66: #{cell_forward.1} parent=59 // loop_footer_branch
                %2368 = sbr.rel target = $region62
              $region67: #{cell_forward.1} parent=59 // loop_exit
                _
            $region60: #{cell_forward.1} parent=51 // pred_fallthru
              _
          $region52: #{cell_forward.1} parent=47 // pred_fallthru
            _
          %2420 = vnop
        $region48: #{cell_forward.1} parent=39 // pred_fallthru
          _
      $region40: #{cell_forward.1} parent=5 // pred_fallthru
        _
      %p2421 = scmp.le.s32.totalorder 2, %s12
      // Predicated region
      $region83: #{cell_forward.1} parent=5 // pred_check
        %p2422 = pneg %p2421
      $region84: #{cell_forward.1} parent=5 // pred_check_branch
        %2424 = sbr.rel (%p2422) target = $region86
      $region85: #{cell_forward.1} parent=5 // pred_region
        %s2425 = ssub.s32 %s12, 2
        // Predicated region
        $region87: #{cell_forward.1} parent=85 // pred_check
          %p2426 = pneg %p156
        $region88: #{cell_forward.1} parent=85 // pred_check_branch
          %2428 = sbr.rel (%p2426) target = $region90
        $region89: #{cell_forward.1} parent=85 // pred_region
          %s2429 = sand.u32 %s141, 1
          %s2430 = sand.u32 %s141, 1
          %s2431 = smul.addr %s2430, 64
          %s2432 = scalar_lea.vmem [#allocation4], %s2431
        $region90: #{cell_forward.1} parent=85 // pred_fallthru
          _
      $region86: #{cell_forward.1} parent=5 // pred_fallthru
        _
    $region6: #{cell_forward.1} parent=1 // loop_footer
      %s16 = sadd.s32 1, %s12
    $region7: #{cell_forward.1} parent=1 // loop_footer_branch
      %11 = sbr.rel target = $region3
    $region8: #{cell_forward.1} parent=1 // loop_exit
      _
    %2433 = vsyncpa [#allocation3], 1
    %s2434 = scalar_lea.sflag [#allocation3], 1
    %2435 = vsyncpa %s2434, 1

</llo_original>
